<compile_context>
chip_gen: v6e
topology: v6e:2x2x1
jax: 0.10.0
libtpu: 0.0.40
codegen_flags: <defaults>
</compile_context>

<pallas_src>
import jax
import jax.numpy as jnp
from jax.experimental import pallas as pl
from jax.experimental.pallas import tpu as pltpu

HIDDEN = 768
FC1 = 512
NUM_CLASSES = 3
PADC = 128          # class dim padded to one full lane width
NEG_BIG = -1e30     # pad-logit bias: exp() underflows to exactly 0


def head_kernel(cls_ref, w1_ref, b1_ref, w2_ref, b2_ref, out_ref):
    # fc1: bf16 activations/weights streamed, f32 accumulate on the MXU
    h = jnp.dot(cls_ref[...], w1_ref[...], preferred_element_type=jnp.float32)
    h = jnp.maximum(h + b1_ref[...], 0.0)          # bias + ReLU in f32
    # Dropout(p=0.1): identity at inference time (matches module.eval()).
    # fc2 over the lane-padded class dim: pad columns of W2 are 0, pad bias is -1e30.
    logits = jnp.dot(h, w2_ref[...], preferred_element_type=jnp.float32) + b2_ref[...]
    # Numerically stable log-softmax over the lane axis; pad lanes contribute exp(-huge)=0,
    # so the result on the first NUM_CLASSES lanes equals log_softmax over the real classes.
    m = jnp.max(logits, axis=-1, keepdims=True)
    s = logits - m
    lse = jnp.log(jnp.sum(jnp.exp(s), axis=-1, keepdims=True))
    out_ref[...] = s - lse


def arch_head(cls_hs, w1, b1, w2, b2, *, tb=256):
    """fc1 -> ReLU -> dropout(eval) -> fc2 -> LogSoftmax(dim=1).

    cls_hs: (B, 768); w1: (768, 512); b1: (512,) or (1, 512);
    w2: (512, 3);  b2: (3,) or (1, 3).  Returns (B, 3) f32 log-probabilities.
    tb: batch tile (rows per grid step). 256 matches the v6e/v7x 256x256 MXU;
        128 is enough on v5e.
    """
    B = cls_hs.shape[0]
    # Batch tile: multiple of 8 sublanes, never (much) larger than B itself.
    TB = min(tb, ((B + 7) // 8) * 8)
    Bp = ((B + TB - 1) // TB) * TB
    if Bp != B:
        cls_hs = jnp.pad(cls_hs, ((0, Bp - B), (0, 0)))

    # bf16 streaming for the bandwidth-dominant operands; accumulation stays f32.
    cls_bf = cls_hs.astype(jnp.bfloat16)
    w1_bf = jnp.asarray(w1).astype(jnp.bfloat16)
    b1_f = jnp.asarray(b1, jnp.float32).reshape(1, FC1)

    # Lane-dense padded class dim: zero weight columns, -1e30 bias on pad lanes.
    w2_p = jnp.zeros((FC1, PADC), jnp.float32).at[:, :NUM_CLASSES].set(
        jnp.asarray(w2, jnp.float32))
    b2_p = jnp.full((1, PADC), NEG_BIG, jnp.float32).at[0, :NUM_CLASSES].set(
        jnp.asarray(b2, jnp.float32).reshape(-1))

    grid = (Bp // TB,)
    const = lambda i: (0, 0)   # weights: same block every grid step -> stay resident

    cost = pl.CostEstimate(
        flops=2 * Bp * HIDDEN * FC1 + 2 * Bp * FC1 * PADC,
        transcendentals=Bp * (PADC + 1),
        bytes_accessed=(cls_bf.size * 2 + w1_bf.size * 2
                        + (b1_f.size + w2_p.size + b2_p.size) * 4
                        + Bp * PADC * 4),
    )

    out_p = pl.pallas_call(
        head_kernel,
        out_shape=jax.ShapeDtypeStruct((Bp, PADC), jnp.float32),
        grid=grid,
        in_specs=[
            pl.BlockSpec((TB, HIDDEN), lambda i: (i, 0)),   # batch-tiled activations
            pl.BlockSpec((HIDDEN, FC1), const),             # W1 resident across grid
            pl.BlockSpec((1, FC1), const),
            pl.BlockSpec((FC1, PADC), const),
            pl.BlockSpec((1, PADC), const),
        ],
        out_specs=pl.BlockSpec((TB, PADC), lambda i: (i, 0)),
        compiler_params=pltpu.CompilerParams(
            dimension_semantics=("parallel",)),
        cost_estimate=cost,
    )(cls_bf, w1_bf, b1_f, w2_p, b2_p)

    return out_p[:B, :NUM_CLASSES]


if __name__ == "__main__":
    key = jax.random.PRNGKey(0)
    k_x, k1, k2, k3, k4 = jax.random.split(key, 5)

    B = 2  # small batch
    # Pooled [CLS] hidden state stand-in for roberta(sent_id, mask) output.
    cls_hs = jax.random.normal(k_x, (B, HIDDEN), jnp.float32)

    # Deterministic synthetic init (uniform, roughly nn.Linear default scale).
    lim1 = 1.0 / jnp.sqrt(HIDDEN)
    lim2 = 1.0 / jnp.sqrt(FC1)
    w1 = jax.random.uniform(k1, (HIDDEN, FC1), jnp.float32, -lim1, lim1)
    b1 = jax.random.uniform(k2, (FC1,), jnp.float32, -lim1, lim1)
    w2 = jax.random.uniform(k3, (FC1, NUM_CLASSES), jnp.float32, -lim2, lim2)
    b2 = jax.random.uniform(k4, (NUM_CLASSES,), jnp.float32, -lim2, lim2)

    out = jax.block_until_ready(arch_head(cls_hs, w1, b1, w2, b2))

    # Reference in plain JAX on the same bf16-quantized streaming operands.
    x_q = cls_hs.astype(jnp.bfloat16).astype(jnp.float32)
    w1_q = w1.astype(jnp.bfloat16).astype(jnp.float32)
    h_ref = jnp.maximum(jnp.dot(x_q, w1_q, precision="highest") + b1, 0.0)
    logits_ref = jnp.dot(h_ref, w2, precision="highest") + b2
    ref = jax.nn.log_softmax(logits_ref, axis=1)

    assert out.shape == (B, NUM_CLASSES)
    max_err = jnp.max(jnp.abs(out - ref))
    assert jnp.allclose(out, ref, atol=5e-3, rtol=5e-3), f"mismatch vs reference (max abs err {max_err})"

    print("KERNEL_OK")
</pallas_src>

<mosaic_0001>
module attributes {stable_mosaic.version = 11 : i64} {
  func.func @head_kernel(%arg0: i32, %arg1: memref<8x768xbf16, #tpu.memory_space<vmem>>, %arg2: memref<768x512xbf16, #tpu.memory_space<vmem>>, %arg3: memref<1x512xf32, #tpu.memory_space<vmem>>, %arg4: memref<512x128xf32, #tpu.memory_space<vmem>>, %arg5: memref<1x128xf32, #tpu.memory_space<vmem>>, %arg6: memref<8x128xf32, #tpu.memory_space<vmem>>) attributes {dimension_semantics = [#tpu.dimension_semantics<parallel>], iteration_bounds = array<i64: 1>, scalar_prefetch = 0 : i64, scratch_operands = 0 : i64, tpu.core_type = #tpu.core_type<tc>, window_params = [{transform_indices = @transform_0, window_bounds = array<i64: 8, 768>}, {pipeline_mode = #tpu.pipeline_mode<synchronous>, transform_indices = @transform_1, window_bounds = array<i64: 768, 512>}, {pipeline_mode = #tpu.pipeline_mode<synchronous>, transform_indices = @transform_2, window_bounds = array<i64: 1, 512>}, {pipeline_mode = #tpu.pipeline_mode<synchronous>, transform_indices = @transform_3, window_bounds = array<i64: 512, 128>}, {pipeline_mode = #tpu.pipeline_mode<synchronous>, transform_indices = @transform_4, window_bounds = array<i64: 1, 128>}, {transform_indices = @transform_5, window_bounds = array<i64: 8, 128>}]} {
    %c0 = arith.constant 0 : index
    %c0_0 = arith.constant 0 : index
    %0 = vector.load %arg1[%c0, %c0_0] : memref<8x768xbf16, #tpu.memory_space<vmem>>, vector<8x768xbf16>
    %c0_1 = arith.constant 0 : index
    %c0_2 = arith.constant 0 : index
    %1 = vector.load %arg2[%c0_1, %c0_2] : memref<768x512xbf16, #tpu.memory_space<vmem>>, vector<768x512xbf16>
    %cst = arith.constant dense<0.000000e+00> : vector<8x512xf32>
    %2 = tpu.matmul %0, %1, %cst {dimension_numbers = #tpu.dot_dimension_numbers<[1], [0], [0], [1], [0, 0, 1, 1], [], []>} : vector<8x768xbf16>, vector<768x512xbf16>, vector<8x512xf32> -> vector<8x512xf32>
    %c0_3 = arith.constant 0 : index
    %c0_4 = arith.constant 0 : index
    %3 = vector.load %arg3[%c0_3, %c0_4] : memref<1x512xf32, #tpu.memory_space<vmem>>, vector<1x512xf32>
    %4 = vector.broadcast %3 : vector<1x512xf32> to vector<8x512xf32>
    %5 = arith.addf %2, %4 : vector<8x512xf32>
    %cst_5 = arith.constant 0.000000e+00 : f32
    %6 = vector.broadcast %cst_5 : f32 to vector<8x512xf32>
    %7 = arith.maximumf %5, %6 : vector<8x512xf32>
    %c0_6 = arith.constant 0 : index
    %c0_7 = arith.constant 0 : index
    %8 = vector.load %arg4[%c0_6, %c0_7] : memref<512x128xf32, #tpu.memory_space<vmem>>, vector<512x128xf32>
    %cst_8 = arith.constant dense<0.000000e+00> : vector<8x128xf32>
    %9 = tpu.matmul %7, %8, %cst_8 {dimension_numbers = #tpu.dot_dimension_numbers<[1], [0], [0], [1], [0, 0, 1, 1], [], []>} : vector<8x512xf32>, vector<512x128xf32>, vector<8x128xf32> -> vector<8x128xf32>
    %c0_9 = arith.constant 0 : index
    %c0_10 = arith.constant 0 : index
    %10 = vector.load %arg5[%c0_9, %c0_10] : memref<1x128xf32, #tpu.memory_space<vmem>>, vector<1x128xf32>
    %11 = vector.broadcast %10 : vector<1x128xf32> to vector<8x128xf32>
    %12 = arith.addf %9, %11 : vector<8x128xf32>
    %cst_11 = arith.constant dense<0xFF800000> : vector<8xf32>
    %13 = vector.multi_reduction <maximumf>, %12, %cst_11 [1] : vector<8x128xf32> to vector<8xf32>
    %14 = vector.shape_cast %13 : vector<8xf32> to vector<8x1xf32>
    %15 = vector.broadcast %14 : vector<8x1xf32> to vector<8x128xf32>
    %16 = arith.subf %12, %15 : vector<8x128xf32>
    %17 = math.exp %16 : vector<8x128xf32>
    %cst_12 = arith.constant dense<0.000000e+00> : vector<8xf32>
    %18 = vector.multi_reduction <add>, %17, %cst_12 [1] : vector<8x128xf32> to vector<8xf32>
    %19 = vector.shape_cast %18 : vector<8xf32> to vector<8x1xf32>
    %20 = math.log %19 : vector<8x1xf32>
    %21 = vector.broadcast %20 : vector<8x1xf32> to vector<8x128xf32>
    %22 = arith.subf %16, %21 : vector<8x128xf32>
    %c0_13 = arith.constant 0 : index
    %c0_14 = arith.constant 0 : index
    %23 = vector.load %arg6[%c0_13, %c0_14] : memref<8x128xf32, #tpu.memory_space<vmem>>, vector<8x128xf32>
    tpu.vector_store %arg6[%c0_13, %c0_14], %22 {strides = array<i32>} : memref<8x128xf32, #tpu.memory_space<vmem>>, vector<8x128xf32>,
    return
  }
  func.func @transform_0(%arg0: i32) -> (i32, i32) {
    %c0_i32 = arith.constant 0 : i32
    %c0_i32_0 = arith.constant 0 : i32
    return %arg0, %c0_i32 : i32, i32
  }
  func.func @transform_1(%arg0: i32) -> (i32, i32) {
    %c0_i32 = arith.constant 0 : i32
    %c0_i32_0 = arith.constant 0 : i32
    %c0_i32_1 = arith.constant 0 : i32
    return %c0_i32, %c0_i32_0 : i32, i32
  }
  func.func @transform_2(%arg0: i32) -> (i32, i32) {
    %c0_i32 = arith.constant 0 : i32
    %c0_i32_0 = arith.constant 0 : i32
    %c0_i32_1 = arith.constant 0 : i32
    return %c0_i32, %c0_i32_0 : i32, i32
  }
  func.func @transform_3(%arg0: i32) -> (i32, i32) {
    %c0_i32 = arith.constant 0 : i32
    %c0_i32_0 = arith.constant 0 : i32
    %c0_i32_1 = arith.constant 0 : i32
    return %c0_i32, %c0_i32_0 : i32, i32
  }
  func.func @transform_4(%arg0: i32) -> (i32, i32) {
    %c0_i32 = arith.constant 0 : i32
    %c0_i32_0 = arith.constant 0 : i32
    %c0_i32_1 = arith.constant 0 : i32
    return %c0_i32, %c0_i32_0 : i32, i32
  }
  func.func @transform_5(%arg0: i32) -> (i32, i32) {
    %c0_i32 = arith.constant 0 : i32
    %c0_i32_0 = arith.constant 0 : i32
    return %arg0, %c0_i32 : i32, i32
  }
}

</mosaic_0001>

<llo_original>
// kernel: tpu_custom_call.1
$region0: #{tpu_custom_call.1}
  #allocation0 [shape = 'u32[]', space=smem, size = 0x4, offset = 0x4, fixed_abs, tag = 'smem constant byte address 0x4 - core index']
  #allocation1 [shape = 'u32[144,128]{1,0:T(1,128)}', space=vmem, size = 0x12000, scoped, tag = 'internal scratch']
  %s0 = inlined_call_operand.hbm [shape: bf16[8,768], index: 0, kind: input, shape index: {}]
  %s1 = inlined_call_operand.hbm [shape: bf16[768,512], index: 1, kind: input, shape index: {}]
  %s2 = inlined_call_operand.hbm [shape: f32[1,512], index: 2, kind: input, shape index: {}]
  %s3 = inlined_call_operand.hbm [shape: f32[512,128], index: 3, kind: input, shape index: {}]
  %s4 = inlined_call_operand.vmem [shape: f32[1,128], index: 4, kind: input, shape index: {}]
  %s5 = inlined_call_operand.hbm [shape: f32[8,128], index: 5, kind: output, shape index: {}]
  %s6 = sld [smem:[#allocation0]]
  $region46: #{tpu_custom_call.1} parent=0
    _
  %s8 = ssub.s32 1, %s6
  %s9 = scalar_select 0, %s8, %s6
  $region1: #{tpu_custom_call.1} parent=0
    #allocation2 [shape = 'u8[12288]{0}', space=vmem, size = 0x3000, scoped, tag = 'input window, operand 0, single buffered']
    #allocation3 [shape = 's32[1]{0}', space=sflag, size = 0x4, scoped, tag = 'scoped memory for tpu_custom_call.1']
    #allocation4 [shape = 's32[1]{0}', space=sflag, size = 0x4, scoped, tag = 'scoped memory for tpu_custom_call.1']
    #allocation5 [shape = 'u8[786432]{0}', space=vmem, size = 0xc0000, scoped, tag = 'input window, operand 1, single buffered']
    #allocation6 [shape = 's32[1]{0}', space=sflag, size = 0x4, scoped, tag = 'scoped memory for tpu_custom_call.1']
    #allocation7 [shape = 'u8[2048]{0}', space=vmem, size = 0x800, scoped, tag = 'input window, operand 2, single buffered']
    #allocation8 [shape = 'u8[262144]{0}', space=vmem, size = 0x40000, scoped, tag = 'input window, operand 3, single buffered']
    #allocation9 [shape = 's32[1]{0}', space=sflag, size = 0x4, scoped, tag = 'scoped memory for tpu_custom_call.1']
    #allocation10 [shape = 'u8[4096]{0}', space=vmem, size = 0x1000, scoped, tag = 'output window, operand 0, single buffered']
    %10 = vsyncpa [#allocation3], 0
    %11 = vsyncpa [#allocation6], 0
    %12 = vsyncpa [#allocation9], 0
    %13 = vsyncpa [#allocation4], 0
    // Predicated region
    $region2: #{tpu_custom_call.1} parent=1 // pred_check
      _
    $region3: #{tpu_custom_call.1} parent=1 // pred_check_branch
      %15 = sbr.rel (0) target = $region5
    $region4: #{tpu_custom_call.1} parent=1 // pred_region
      %s17 = ssub.s32 384, 384
      %18 = vsyncadd [#allocation3], %s17
      %s20 = sshll.u32 [#allocation2], 4
      %s21 = int_to_ptr.vmem [resolvable:$true] %s20
      %23 = dma.hbm_to_vmem [thread:$0]  %s0, 384, %s21, [#allocation3]
    $region5: #{tpu_custom_call.1} parent=1 // pred_fallthru
      _
    // Predicated region
    $region6: #{tpu_custom_call.1} parent=1 // pred_check
      _
    $region7: #{tpu_custom_call.1} parent=1 // pred_check_branch
      %25 = sbr.rel (0) target = $region9
    $region8: #{tpu_custom_call.1} parent=1 // pred_region
      %s27 = ssub.s32 24576, 24576
      %28 = vsyncadd [#allocation6], %s27
      %s29 = sshll.u32 [#allocation5], 4
      %s30 = int_to_ptr.vmem [resolvable:$true] %s29
      %35 = dma.hbm_to_vmem [thread:$0]  %s1, 24576, %s30, [#allocation6], 256, 256, 16
    $region9: #{tpu_custom_call.1} parent=1 // pred_fallthru
      _
    // Predicated region
    $region10: #{tpu_custom_call.1} parent=1 // pred_check
      _
    $region11: #{tpu_custom_call.1} parent=1 // pred_check_branch
      %37 = sbr.rel (0) target = $region13
    $region12: #{tpu_custom_call.1} parent=1 // pred_region
      %s39 = ssub.s32 64, 64
      %40 = vsyncadd [#allocation6], %s39
      %s42 = sshll.u32 [#allocation7], 4
      %s43 = int_to_ptr.vmem [resolvable:$true] %s42
      %45 = dma.hbm_to_vmem [thread:$0]  %s2, 64, %s43, [#allocation6]
    $region13: #{tpu_custom_call.1} parent=1 // pred_fallthru
      _
    // Predicated region
    $region14: #{tpu_custom_call.1} parent=1 // pred_check
      _
    $region15: #{tpu_custom_call.1} parent=1 // pred_check_branch
      %47 = sbr.rel (0) target = $region17
    $region16: #{tpu_custom_call.1} parent=1 // pred_region
      %s49 = ssub.s32 8192, 8192
      %50 = vsyncadd [#allocation9], %s49
      %s51 = sshll.u32 [#allocation8], 4
      %s52 = int_to_ptr.vmem [resolvable:$true] %s51
      %57 = dma.hbm_to_vmem [thread:$0]  %s3, 8192, %s52, [#allocation9], 128, 128, 8
    $region17: #{tpu_custom_call.1} parent=1 // pred_fallthru
      _
    // Predicated region
    $region18: #{tpu_custom_call.1} parent=1 // pred_check
      _
    $region19: #{tpu_custom_call.1} parent=1 // pred_check_branch
      %59 = sbr.rel (0) target = $region21
    $region20: #{tpu_custom_call.1} parent=1 // pred_region
      _
    $region21: #{tpu_custom_call.1} parent=1 // pred_fallthru
      _
    // Predicated region
    $region22: #{tpu_custom_call.1} parent=1 // pred_check
      _
    $region23: #{tpu_custom_call.1} parent=1 // pred_check_branch
      %61 = sbr.rel (0) target = $region25
    $region24: #{tpu_custom_call.1} parent=1 // pred_region
      %62 = dma.done [#allocation3], 384
    $region25: #{tpu_custom_call.1} parent=1 // pred_fallthru
      _
    // Predicated region
    $region26: #{tpu_custom_call.1} parent=1 // pred_check
      _
    $region27: #{tpu_custom_call.1} parent=1 // pred_check_branch
      %64 = sbr.rel (0) target = $region29
    $region28: #{tpu_custom_call.1} parent=1 // pred_region
      %65 = dma.done [#allocation6], 24576
    $region29: #{tpu_custom_call.1} parent=1 // pred_fallthru
      _
    // Predicated region
    $region30: #{tpu_custom_call.1} parent=1 // pred_check
      _
    $region31: #{tpu_custom_call.1} parent=1 // pred_check_branch
      %67 = sbr.rel (0) target = $region33
    $region32: #{tpu_custom_call.1} parent=1 // pred_region
      %68 = dma.done [#allocation6], 64
    $region33: #{tpu_custom_call.1} parent=1 // pred_fallthru
      _
    // Predicated region
    $region34: #{tpu_custom_call.1} parent=1 // pred_check
      _
    $region35: #{tpu_custom_call.1} parent=1 // pred_check_branch
      %70 = sbr.rel (0) target = $region37
    $region36: #{tpu_custom_call.1} parent=1 // pred_region
      %71 = dma.done [#allocation9], 8192
    $region37: #{tpu_custom_call.1} parent=1 // pred_fallthru
      _
    %v72 = vld [vmem:[#allocation2] sm:$0xff]
    %v73 = vld [vmem:[#allocation2 + $0x8] sm:$0xff]
    %v74 = vld [vmem:[#allocation2 + $0x10] sm:$0xff]
    %v75 = vld [vmem:[#allocation5] sm:$0xff]
    %v76 = vld [vmem:[#allocation5 + $0x8] sm:$0xff]
    %v77 = vld [vmem:[#allocation5 + $0x10] sm:$0xff]
    %v78 = vld [vmem:[#allocation5 + $0x18] sm:$0xff]
    %v79 = vld [vmem:[#allocation5 + $0x20] sm:$0xff]
    %v80 = vld [vmem:[#allocation5 + $0x28] sm:$0xff]
    %v81 = vld [vmem:[#allocation5 + $0x30] sm:$0xff]
    %v82 = vld [vmem:[#allocation5 + $0x38] sm:$0xff]
    %v83 = vld [vmem:[#allocation5 + $0x40] sm:$0xff]
    %v84 = vld [vmem:[#allocation5 + $0x48] sm:$0xff]
    %v85 = vld [vmem:[#allocation5 + $0x50] sm:$0xff]
    %v86 = vld [vmem:[#allocation5 + $0x58] sm:$0xff]
    %v87 = vld [vmem:[#allocation5 + $0x60] sm:$0xff]
    %v88 = vld [vmem:[#allocation5 + $0x68] sm:$0xff]
    %v89 = vld [vmem:[#allocation5 + $0x70] sm:$0xff]
    %v90 = vld [vmem:[#allocation5 + $0x78] sm:$0xff]
    %v91 = vld [vmem:[#allocation5 + $0x80] sm:$0xff]
    %v92 = vld [vmem:[#allocation5 + $0x88] sm:$0xff]
    %v93 = vld [vmem:[#allocation5 + $0x90] sm:$0xff]
    %v94 = vld [vmem:[#allocation5 + $0x98] sm:$0xff]
    %v95 = vld [vmem:[#allocation5 + $0xa0] sm:$0xff]
    %v96 = vld [vmem:[#allocation5 + $0xa8] sm:$0xff]
    %v97 = vld [vmem:[#allocation5 + $0xb0] sm:$0xff]
    %v98 = vld [vmem:[#allocation5 + $0xb8] sm:$0xff]
    %v99 = vld [vmem:[#allocation5 + $0xc0] sm:$0xff]
    %v100 = vld [vmem:[#allocation5 + $0xc8] sm:$0xff]
    %v101 = vld [vmem:[#allocation5 + $0xd0] sm:$0xff]
    %v102 = vld [vmem:[#allocation5 + $0xd8] sm:$0xff]
    %v103 = vld [vmem:[#allocation5 + $0xe0] sm:$0xff]
    %v104 = vld [vmem:[#allocation5 + $0xe8] sm:$0xff]
    %v105 = vld [vmem:[#allocation5 + $0xf0] sm:$0xff]
    %v106 = vld [vmem:[#allocation5 + $0xf8] sm:$0xff]
    %v107 = vld [vmem:[#allocation5 + $0x100] sm:$0xff]
    %v108 = vld [vmem:[#allocation5 + $0x108] sm:$0xff]
    %v109 = vld [vmem:[#allocation5 + $0x110] sm:$0xff]
    %v110 = vld [vmem:[#allocation5 + $0x118] sm:$0xff]
    %v111 = vld [vmem:[#allocation5 + $0x120] sm:$0xff]
    %v112 = vld [vmem:[#allocation5 + $0x128] sm:$0xff]
    %v113 = vld [vmem:[#allocation5 + $0x130] sm:$0xff]
    %v114 = vld [vmem:[#allocation5 + $0x138] sm:$0xff]
    %v115 = vld [vmem:[#allocation5 + $0x140] sm:$0xff]
    %v116 = vld [vmem:[#allocation5 + $0x148] sm:$0xff]
    %v117 = vld [vmem:[#allocation5 + $0x150] sm:$0xff]
    %v118 = vld [vmem:[#allocation5 + $0x158] sm:$0xff]
    %v119 = vld [vmem:[#allocation5 + $0x160] sm:$0xff]
    %v120 = vld [vmem:[#allocation5 + $0x168] sm:$0xff]
    %v121 = vld [vmem:[#allocation5 + $0x170] sm:$0xff]
    %v122 = vld [vmem:[#allocation5 + $0x178] sm:$0xff]
    %v123 = vld [vmem:[#allocation5 + $0x180] sm:$0xff]
    %v124 = vld [vmem:[#allocation5 + $0x188] sm:$0xff]
    %v125 = vld [vmem:[#allocation5 + $0x190] sm:$0xff]
    %v126 = vld [vmem:[#allocation5 + $0x198] sm:$0xff]
    %v127 = vld [vmem:[#allocation5 + $0x1a0] sm:$0xff]
    %v128 = vld [vmem:[#allocation5 + $0x1a8] sm:$0xff]
    %v129 = vld [vmem:[#allocation5 + $0x1b0] sm:$0xff]
    %v130 = vld [vmem:[#allocation5 + $0x1b8] sm:$0xff]
    %v131 = vld [vmem:[#allocation5 + $0x1c0] sm:$0xff]
    %v132 = vld [vmem:[#allocation5 + $0x1c8] sm:$0xff]
    %v133 = vld [vmem:[#allocation5 + $0x1d0] sm:$0xff]
    %v134 = vld [vmem:[#allocation5 + $0x1d8] sm:$0xff]
    %v135 = vld [vmem:[#allocation5 + $0x1e0] sm:$0xff]
    %v136 = vld [vmem:[#allocation5 + $0x1e8] sm:$0xff]
    %v137 = vld [vmem:[#allocation5 + $0x1f0] sm:$0xff]
    %v138 = vld [vmem:[#allocation5 + $0x1f8] sm:$0xff]
    %v139 = vld [vmem:[#allocation5 + $0x200] sm:$0xff]
    %v140 = vld [vmem:[#allocation5 + $0x208] sm:$0xff]
    %v141 = vld [vmem:[#allocation5 + $0x210] sm:$0xff]
    %v142 = vld [vmem:[#allocation5 + $0x218] sm:$0xff]
    %v143 = vld [vmem:[#allocation5 + $0x220] sm:$0xff]
    %v144 = vld [vmem:[#allocation5 + $0x228] sm:$0xff]
    %v145 = vld [vmem:[#allocation5 + $0x230] sm:$0xff]
    %v146 = vld [vmem:[#allocation5 + $0x238] sm:$0xff]
    %v147 = vld [vmem:[#allocation5 + $0x240] sm:$0xff]
    %v148 = vld [vmem:[#allocation5 + $0x248] sm:$0xff]
    %v149 = vld [vmem:[#allocation5 + $0x250] sm:$0xff]
    %v150 = vld [vmem:[#allocation5 + $0x258] sm:$0xff]
    %v151 = vld [vmem:[#allocation5 + $0x260] sm:$0xff]
    %v152 = vld [vmem:[#allocation5 + $0x268] sm:$0xff]
    %v153 = vld [vmem:[#allocation5 + $0x270] sm:$0xff]
    %v154 = vld [vmem:[#allocation5 + $0x278] sm:$0xff]
    %v155 = vld [vmem:[#allocation5 + $0x280] sm:$0xff]
    %v156 = vld [vmem:[#allocation5 + $0x288] sm:$0xff]
    %v157 = vld [vmem:[#allocation5 + $0x290] sm:$0xff]
    %v158 = vld [vmem:[#allocation5 + $0x298] sm:$0xff]
    %v159 = vld [vmem:[#allocation5 + $0x2a0] sm:$0xff]
    %v160 = vld [vmem:[#allocation5 + $0x2a8] sm:$0xff]
    %v161 = vld [vmem:[#allocation5 + $0x2b0] sm:$0xff]
    %v162 = vld [vmem:[#allocation5 + $0x2b8] sm:$0xff]
    %v163 = vld [vmem:[#allocation5 + $0x2c0] sm:$0xff]
    %v164 = vld [vmem:[#allocation5 + $0x2c8] sm:$0xff]
    %v165 = vld [vmem:[#allocation5 + $0x2d0] sm:$0xff]
    %v166 = vld [vmem:[#allocation5 + $0x2d8] sm:$0xff]
    %v167 = vld [vmem:[#allocation5 + $0x2e0] sm:$0xff]
    %v168 = vld [vmem:[#allocation5 + $0x2e8] sm:$0xff]
    %v169 = vld [vmem:[#allocation5 + $0x2f0] sm:$0xff]
    %v170 = vld [vmem:[#allocation5 + $0x2f8] sm:$0xff]
    %v171 = vld [vmem:[#allocation5 + $0x300] sm:$0xff]
    %v172 = vld [vmem:[#allocation5 + $0x308] sm:$0xff]
    %v173 = vld [vmem:[#allocation5 + $0x310] sm:$0xff]
    %v174 = vld [vmem:[#allocation5 + $0x318] sm:$0xff]
    %v175 = vld [vmem:[#allocation5 + $0x320] sm:$0xff]
    %v176 = vld [vmem:[#allocation5 + $0x328] sm:$0xff]
    %v177 = vld [vmem:[#allocation5 + $0x330] sm:$0xff]
    %v178 = vld [vmem:[#allocation5 + $0x338] sm:$0xff]
    %v179 = vld [vmem:[#allocation5 + $0x340] sm:$0xff]
    %v180 = vld [vmem:[#allocation5 + $0x348] sm:$0xff]
    %v181 = vld [vmem:[#allocation5 + $0x350] sm:$0xff]
    %v182 = vld [vmem:[#allocation5 + $0x358] sm:$0xff]
    %v183 = vld [vmem:[#allocation5 + $0x360] sm:$0xff]
    %v184 = vld [vmem:[#allocation5 + $0x368] sm:$0xff]
    %v185 = vld [vmem:[#allocation5 + $0x370] sm:$0xff]
    %v186 = vld [vmem:[#allocation5 + $0x378] sm:$0xff]
    %v187 = vld [vmem:[#allocation5 + $0x380] sm:$0xff]
    %v188 = vld [vmem:[#allocation5 + $0x388] sm:$0xff]
    %v189 = vld [vmem:[#allocation5 + $0x390] sm:$0xff]
    %v190 = vld [vmem:[#allocation5 + $0x398] sm:$0xff]
    %v191 = vld [vmem:[#allocation5 + $0x3a0] sm:$0xff]
    %v192 = vld [vmem:[#allocation5 + $0x3a8] sm:$0xff]
    %v193 = vld [vmem:[#allocation5 + $0x3b0] sm:$0xff]
    %v194 = vld [vmem:[#allocation5 + $0x3b8] sm:$0xff]
    %v195 = vld [vmem:[#allocation5 + $0x3c0] sm:$0xff]
    %v196 = vld [vmem:[#allocation5 + $0x3c8] sm:$0xff]
    %v197 = vld [vmem:[#allocation5 + $0x3d0] sm:$0xff]
    %v198 = vld [vmem:[#allocation5 + $0x3d8] sm:$0xff]
    %v199 = vld [vmem:[#allocation5 + $0x3e0] sm:$0xff]
    %v200 = vld [vmem:[#allocation5 + $0x3e8] sm:$0xff]
    %v201 = vld [vmem:[#allocation5 + $0x3f0] sm:$0xff]
    %v202 = vld [vmem:[#allocation5 + $0x3f8] sm:$0xff]
    %v203 = vld [vmem:[#allocation5 + $0x400] sm:$0xff]
    %v204 = vld [vmem:[#allocation5 + $0x408] sm:$0xff]
    %v205 = vld [vmem:[#allocation5 + $0x410] sm:$0xff]
    %v206 = vld [vmem:[#allocation5 + $0x418] sm:$0xff]
    %v207 = vld [vmem:[#allocation5 + $0x420] sm:$0xff]
    %v208 = vld [vmem:[#allocation5 + $0x428] sm:$0xff]
    %v209 = vld [vmem:[#allocation5 + $0x430] sm:$0xff]
    %v210 = vld [vmem:[#allocation5 + $0x438] sm:$0xff]
    %v211 = vld [vmem:[#allocation5 + $0x440] sm:$0xff]
    %v212 = vld [vmem:[#allocation5 + $0x448] sm:$0xff]
    %v213 = vld [vmem:[#allocation5 + $0x450] sm:$0xff]
    %v214 = vld [vmem:[#allocation5 + $0x458] sm:$0xff]
    %v215 = vld [vmem:[#allocation5 + $0x460] sm:$0xff]
    %v216 = vld [vmem:[#allocation5 + $0x468] sm:$0xff]
    %v217 = vld [vmem:[#allocation5 + $0x470] sm:$0xff]
    %v218 = vld [vmem:[#allocation5 + $0x478] sm:$0xff]
    %v219 = vld [vmem:[#allocation5 + $0x480] sm:$0xff]
    %v220 = vld [vmem:[#allocation5 + $0x488] sm:$0xff]
    %v221 = vld [vmem:[#allocation5 + $0x490] sm:$0xff]
    %v222 = vld [vmem:[#allocation5 + $0x498] sm:$0xff]
    %v223 = vld [vmem:[#allocation5 + $0x4a0] sm:$0xff]
    %v224 = vld [vmem:[#allocation5 + $0x4a8] sm:$0xff]
    %v225 = vld [vmem:[#allocation5 + $0x4b0] sm:$0xff]
    %v226 = vld [vmem:[#allocation5 + $0x4b8] sm:$0xff]
    %v227 = vld [vmem:[#allocation5 + $0x4c0] sm:$0xff]
    %v228 = vld [vmem:[#allocation5 + $0x4c8] sm:$0xff]
    %v229 = vld [vmem:[#allocation5 + $0x4d0] sm:$0xff]
    %v230 = vld [vmem:[#allocation5 + $0x4d8] sm:$0xff]
    %v231 = vld [vmem:[#allocation5 + $0x4e0] sm:$0xff]
    %v232 = vld [vmem:[#allocation5 + $0x4e8] sm:$0xff]
    %v233 = vld [vmem:[#allocation5 + $0x4f0] sm:$0xff]
    %v234 = vld [vmem:[#allocation5 + $0x4f8] sm:$0xff]
    %v235 = vld [vmem:[#allocation5 + $0x500] sm:$0xff]
    %v236 = vld [vmem:[#allocation5 + $0x508] sm:$0xff]
    %v237 = vld [vmem:[#allocation5 + $0x510] sm:$0xff]
    %v238 = vld [vmem:[#allocation5 + $0x518] sm:$0xff]
    %v239 = vld [vmem:[#allocation5 + $0x520] sm:$0xff]
    %v240 = vld [vmem:[#allocation5 + $0x528] sm:$0xff]
    %v241 = vld [vmem:[#allocation5 + $0x530] sm:$0xff]
    %v242 = vld [vmem:[#allocation5 + $0x538] sm:$0xff]
    %v243 = vld [vmem:[#allocation5 + $0x540] sm:$0xff]
    %v244 = vld [vmem:[#allocation5 + $0x548] sm:$0xff]
    %v245 = vld [vmem:[#allocation5 + $0x550] sm:$0xff]
    %v246 = vld [vmem:[#allocation5 + $0x558] sm:$0xff]
    %v247 = vld [vmem:[#allocation5 + $0x560] sm:$0xff]
    %v248 = vld [vmem:[#allocation5 + $0x568] sm:$0xff]
    %v249 = vld [vmem:[#allocation5 + $0x570] sm:$0xff]
    %v250 = vld [vmem:[#allocation5 + $0x578] sm:$0xff]
    %v251 = vld [vmem:[#allocation5 + $0x580] sm:$0xff]
    %v252 = vld [vmem:[#allocation5 + $0x588] sm:$0xff]
    %v253 = vld [vmem:[#allocation5 + $0x590] sm:$0xff]
    %v254 = vld [vmem:[#allocation5 + $0x598] sm:$0xff]
    %v255 = vld [vmem:[#allocation5 + $0x5a0] sm:$0xff]
    %v256 = vld [vmem:[#allocation5 + $0x5a8] sm:$0xff]
    %v257 = vld [vmem:[#allocation5 + $0x5b0] sm:$0xff]
    %v258 = vld [vmem:[#allocation5 + $0x5b8] sm:$0xff]
    %v259 = vld [vmem:[#allocation5 + $0x5c0] sm:$0xff]
    %v260 = vld [vmem:[#allocation5 + $0x5c8] sm:$0xff]
    %v261 = vld [vmem:[#allocation5 + $0x5d0] sm:$0xff]
    %v262 = vld [vmem:[#allocation5 + $0x5d8] sm:$0xff]
    %v263 = vld [vmem:[#allocation5 + $0x5e0] sm:$0xff]
    %v264 = vld [vmem:[#allocation5 + $0x5e8] sm:$0xff]
    %v265 = vld [vmem:[#allocation5 + $0x5f0] sm:$0xff]
    %v266 = vld [vmem:[#allocation5 + $0x5f8] sm:$0xff]
    %v267 = vld [vmem:[#allocation7] sm:$0xf]
    %v269 = vlaneseq
    %v270 = vshrl.u32 %v269, 7
    %v271 = vsub.s32 0, %v270
    %v272 = vrot.slane %v267, %v271
    %v273 = vlaneseq
    %v274 = vshrl.u32 %v273, 7
    %v275 = vsub.s32 1, %v274
    %v276 = vrot.slane %v267, %v275
    %v277 = vlaneseq
    %v278 = vshrl.u32 %v277, 7
    %v279 = vsub.s32 2, %v278
    %v280 = vrot.slane %v267, %v279
    %v281 = vlaneseq
    %v282 = vshrl.u32 %v281, 7
    %v283 = vsub.s32 3, %v282
    %v284 = vrot.slane %v267, %v283
    %v292 = vunpack.c.l.b16 %v72
    %v293 = vunpack.c.h.b16 %v72
    %v294 = vunpack.c.l.b16 %v73
    %v295 = vunpack.c.h.b16 %v73
    %v296 = vunpack.c.l.b16 %v74
    %v297 = vunpack.c.h.b16 %v74
    %v298 = vpack.c.b16 %v292, %v292
    %v299 = vpack.c.b16 %v293, %v293
    %v300 = vpack.c.b16 %v294, %v294
    %v301 = vpack.c.b16 %v295, %v295
    %v302 = vpack.c.b16 %v296, %v296
    %v303 = vpack.c.b16 %v297, %v297
    %v502 = vunpack.c.l.b16 %v75
    %v503 = vunpack.c.h.b16 %v75
    %v504 = vunpack.c.l.b16 %v76
    %v505 = vunpack.c.h.b16 %v76
    %v506 = vunpack.c.l.b16 %v77
    %v507 = vunpack.c.h.b16 %v77
    %v508 = vunpack.c.l.b16 %v78
    %v509 = vunpack.c.h.b16 %v78
    %v510 = vunpack.c.l.b16 %v79
    %v511 = vunpack.c.h.b16 %v79
    %v512 = vunpack.c.l.b16 %v80
    %v513 = vunpack.c.h.b16 %v80
    %v514 = vunpack.c.l.b16 %v81
    %v515 = vunpack.c.h.b16 %v81
    %v516 = vunpack.c.l.b16 %v82
    %v517 = vunpack.c.h.b16 %v82
    %v518 = vunpack.c.l.b16 %v83
    %v519 = vunpack.c.h.b16 %v83
    %v520 = vunpack.c.l.b16 %v84
    %v521 = vunpack.c.h.b16 %v84
    %v522 = vunpack.c.l.b16 %v85
    %v523 = vunpack.c.h.b16 %v85
    %v524 = vunpack.c.l.b16 %v86
    %v525 = vunpack.c.h.b16 %v86
    %v526 = vunpack.c.l.b16 %v87
    %v527 = vunpack.c.h.b16 %v87
    %v528 = vunpack.c.l.b16 %v88
    %v529 = vunpack.c.h.b16 %v88
    %v530 = vunpack.c.l.b16 %v89
    %v531 = vunpack.c.h.b16 %v89
    %v532 = vunpack.c.l.b16 %v90
    %v533 = vunpack.c.h.b16 %v90
    %v534 = vunpack.c.l.b16 %v91
    %v535 = vunpack.c.h.b16 %v91
    %v536 = vunpack.c.l.b16 %v92
    %v537 = vunpack.c.h.b16 %v92
    %v538 = vunpack.c.l.b16 %v93
    %v539 = vunpack.c.h.b16 %v93
    %v540 = vunpack.c.l.b16 %v94
    %v541 = vunpack.c.h.b16 %v94
    %v542 = vunpack.c.l.b16 %v95
    %v543 = vunpack.c.h.b16 %v95
    %v544 = vunpack.c.l.b16 %v96
    %v545 = vunpack.c.h.b16 %v96
    %v546 = vunpack.c.l.b16 %v97
    %v547 = vunpack.c.h.b16 %v97
    %v548 = vunpack.c.l.b16 %v98
    %v549 = vunpack.c.h.b16 %v98
    %v550 = vunpack.c.l.b16 %v99
    %v551 = vunpack.c.h.b16 %v99
    %v552 = vunpack.c.l.b16 %v100
    %v553 = vunpack.c.h.b16 %v100
    %v554 = vunpack.c.l.b16 %v101
    %v555 = vunpack.c.h.b16 %v101
    %v556 = vunpack.c.l.b16 %v102
    %v557 = vunpack.c.h.b16 %v102
    %v558 = vunpack.c.l.b16 %v103
    %v559 = vunpack.c.h.b16 %v103
    %v560 = vunpack.c.l.b16 %v104
    %v561 = vunpack.c.h.b16 %v104
    %v562 = vunpack.c.l.b16 %v105
    %v563 = vunpack.c.h.b16 %v105
    %v564 = vunpack.c.l.b16 %v106
    %v565 = vunpack.c.h.b16 %v106
    %v566 = vunpack.c.l.b16 %v107
    %v567 = vunpack.c.h.b16 %v107
    %v568 = vunpack.c.l.b16 %v108
    %v569 = vunpack.c.h.b16 %v108
    %v570 = vunpack.c.l.b16 %v109
    %v571 = vunpack.c.h.b16 %v109
    %v572 = vunpack.c.l.b16 %v110
    %v573 = vunpack.c.h.b16 %v110
    %v574 = vunpack.c.l.b16 %v111
    %v575 = vunpack.c.h.b16 %v111
    %v576 = vunpack.c.l.b16 %v112
    %v577 = vunpack.c.h.b16 %v112
    %v578 = vunpack.c.l.b16 %v113
    %v579 = vunpack.c.h.b16 %v113
    %v580 = vunpack.c.l.b16 %v114
    %v581 = vunpack.c.h.b16 %v114
    %v582 = vunpack.c.l.b16 %v115
    %v583 = vunpack.c.h.b16 %v115
    %v584 = vunpack.c.l.b16 %v116
    %v585 = vunpack.c.h.b16 %v116
    %v586 = vunpack.c.l.b16 %v117
    %v587 = vunpack.c.h.b16 %v117
    %v588 = vunpack.c.l.b16 %v118
    %v589 = vunpack.c.h.b16 %v118
    %v590 = vunpack.c.l.b16 %v119
    %v591 = vunpack.c.h.b16 %v119
    %v592 = vunpack.c.l.b16 %v120
    %v593 = vunpack.c.h.b16 %v120
    %v594 = vunpack.c.l.b16 %v121
    %v595 = vunpack.c.h.b16 %v121
    %v596 = vunpack.c.l.b16 %v122
    %v597 = vunpack.c.h.b16 %v122
    %v598 = vunpack.c.l.b16 %v123
    %v599 = vunpack.c.h.b16 %v123
    %v600 = vunpack.c.l.b16 %v124
    %v601 = vunpack.c.h.b16 %v124
    %v602 = vunpack.c.l.b16 %v125
    %v603 = vunpack.c.h.b16 %v125
    %v604 = vunpack.c.l.b16 %v126
    %v605 = vunpack.c.h.b16 %v126
    %v606 = vunpack.c.l.b16 %v127
    %v607 = vunpack.c.h.b16 %v127
    %v608 = vunpack.c.l.b16 %v128
    %v609 = vunpack.c.h.b16 %v128
    %v610 = vunpack.c.l.b16 %v129
    %v611 = vunpack.c.h.b16 %v129
    %v612 = vunpack.c.l.b16 %v130
    %v613 = vunpack.c.h.b16 %v130
    %v614 = vunpack.c.l.b16 %v131
    %v615 = vunpack.c.h.b16 %v131
    %v616 = vunpack.c.l.b16 %v132
    %v617 = vunpack.c.h.b16 %v132
    %v618 = vunpack.c.l.b16 %v133
    %v619 = vunpack.c.h.b16 %v133
    %v620 = vunpack.c.l.b16 %v134
    %v621 = vunpack.c.h.b16 %v134
    %v622 = vunpack.c.l.b16 %v135
    %v623 = vunpack.c.h.b16 %v135
    %v624 = vunpack.c.l.b16 %v136
    %v625 = vunpack.c.h.b16 %v136
    %v626 = vunpack.c.l.b16 %v137
    %v627 = vunpack.c.h.b16 %v137
    %v628 = vunpack.c.l.b16 %v138
    %v629 = vunpack.c.h.b16 %v138
    %v630 = vunpack.c.l.b16 %v139
    %v631 = vunpack.c.h.b16 %v139
    %v632 = vunpack.c.l.b16 %v140
    %v633 = vunpack.c.h.b16 %v140
    %v634 = vunpack.c.l.b16 %v141
    %v635 = vunpack.c.h.b16 %v141
    %v636 = vunpack.c.l.b16 %v142
    %v637 = vunpack.c.h.b16 %v142
    %v638 = vunpack.c.l.b16 %v143
    %v639 = vunpack.c.h.b16 %v143
    %v640 = vunpack.c.l.b16 %v144
    %v641 = vunpack.c.h.b16 %v144
    %v642 = vunpack.c.l.b16 %v145
    %v643 = vunpack.c.h.b16 %v145
    %v644 = vunpack.c.l.b16 %v146
    %v645 = vunpack.c.h.b16 %v146
    %v646 = vunpack.c.l.b16 %v147
    %v647 = vunpack.c.h.b16 %v147
    %v648 = vunpack.c.l.b16 %v148
    %v649 = vunpack.c.h.b16 %v148
    %v650 = vunpack.c.l.b16 %v149
    %v651 = vunpack.c.h.b16 %v149
    %v652 = vunpack.c.l.b16 %v150
    %v653 = vunpack.c.h.b16 %v150
    %v654 = vunpack.c.l.b16 %v151
    %v655 = vunpack.c.h.b16 %v151
    %v656 = vunpack.c.l.b16 %v152
    %v657 = vunpack.c.h.b16 %v152
    %v658 = vunpack.c.l.b16 %v153
    %v659 = vunpack.c.h.b16 %v153
    %v660 = vunpack.c.l.b16 %v154
    %v661 = vunpack.c.h.b16 %v154
    %v662 = vunpack.c.l.b16 %v155
    %v663 = vunpack.c.h.b16 %v155
    %v664 = vunpack.c.l.b16 %v156
    %v665 = vunpack.c.h.b16 %v156
    %v666 = vunpack.c.l.b16 %v157
    %v667 = vunpack.c.h.b16 %v157
    %v668 = vunpack.c.l.b16 %v158
    %v669 = vunpack.c.h.b16 %v158
    %v670 = vunpack.c.l.b16 %v159
    %v671 = vunpack.c.h.b16 %v159
    %v672 = vunpack.c.l.b16 %v160
    %v673 = vunpack.c.h.b16 %v160
    %v674 = vunpack.c.l.b16 %v161
    %v675 = vunpack.c.h.b16 %v161
    %v676 = vunpack.c.l.b16 %v162
    %v677 = vunpack.c.h.b16 %v162
    %v678 = vunpack.c.l.b16 %v163
    %v679 = vunpack.c.h.b16 %v163
    %v680 = vunpack.c.l.b16 %v164
    %v681 = vunpack.c.h.b16 %v164
    %v682 = vunpack.c.l.b16 %v165
    %v683 = vunpack.c.h.b16 %v165
    %v684 = vunpack.c.l.b16 %v166
    %v685 = vunpack.c.h.b16 %v166
    %v686 = vunpack.c.l.b16 %v167
    %v687 = vunpack.c.h.b16 %v167
    %v688 = vunpack.c.l.b16 %v168
    %v689 = vunpack.c.h.b16 %v168
    %v690 = vunpack.c.l.b16 %v169
    %v691 = vunpack.c.h.b16 %v169
    %v692 = vunpack.c.l.b16 %v170
    %v693 = vunpack.c.h.b16 %v170
    %v694 = vunpack.c.l.b16 %v171
    %v695 = vunpack.c.h.b16 %v171
    %v696 = vunpack.c.l.b16 %v172
    %v697 = vunpack.c.h.b16 %v172
    %v698 = vunpack.c.l.b16 %v173
    %v699 = vunpack.c.h.b16 %v173
    %v700 = vunpack.c.l.b16 %v174
    %v701 = vunpack.c.h.b16 %v174
    %v702 = vunpack.c.l.b16 %v175
    %v703 = vunpack.c.h.b16 %v175
    %v704 = vunpack.c.l.b16 %v176
    %v705 = vunpack.c.h.b16 %v176
    %v706 = vunpack.c.l.b16 %v177
    %v707 = vunpack.c.h.b16 %v177
    %v708 = vunpack.c.l.b16 %v178
    %v709 = vunpack.c.h.b16 %v178
    %v710 = vunpack.c.l.b16 %v179
    %v711 = vunpack.c.h.b16 %v179
    %v712 = vunpack.c.l.b16 %v180
    %v713 = vunpack.c.h.b16 %v180
    %v714 = vunpack.c.l.b16 %v181
    %v715 = vunpack.c.h.b16 %v181
    %v716 = vunpack.c.l.b16 %v182
    %v717 = vunpack.c.h.b16 %v182
    %v718 = vunpack.c.l.b16 %v183
    %v719 = vunpack.c.h.b16 %v183
    %v720 = vunpack.c.l.b16 %v184
    %v721 = vunpack.c.h.b16 %v184
    %v722 = vunpack.c.l.b16 %v185
    %v723 = vunpack.c.h.b16 %v185
    %v724 = vunpack.c.l.b16 %v186
    %v725 = vunpack.c.h.b16 %v186
    %v726 = vunpack.c.l.b16 %v187
    %v727 = vunpack.c.h.b16 %v187
    %v728 = vunpack.c.l.b16 %v188
    %v729 = vunpack.c.h.b16 %v188
    %v730 = vunpack.c.l.b16 %v189
    %v731 = vunpack.c.h.b16 %v189
    %v732 = vunpack.c.l.b16 %v190
    %v733 = vunpack.c.h.b16 %v190
    %v734 = vunpack.c.l.b16 %v191
    %v735 = vunpack.c.h.b16 %v191
    %v736 = vunpack.c.l.b16 %v192
    %v737 = vunpack.c.h.b16 %v192
    %v738 = vunpack.c.l.b16 %v193
    %v739 = vunpack.c.h.b16 %v193
    %v740 = vunpack.c.l.b16 %v194
    %v741 = vunpack.c.h.b16 %v194
    %v742 = vunpack.c.l.b16 %v195
    %v743 = vunpack.c.h.b16 %v195
    %v744 = vunpack.c.l.b16 %v196
    %v745 = vunpack.c.h.b16 %v196
    %v746 = vunpack.c.l.b16 %v197
    %v747 = vunpack.c.h.b16 %v197
    %v748 = vunpack.c.l.b16 %v198
    %v749 = vunpack.c.h.b16 %v198
    %v750 = vunpack.c.l.b16 %v199
    %v751 = vunpack.c.h.b16 %v199
    %v752 = vunpack.c.l.b16 %v200
    %v753 = vunpack.c.h.b16 %v200
    %v754 = vunpack.c.l.b16 %v201
    %v755 = vunpack.c.h.b16 %v201
    %v756 = vunpack.c.l.b16 %v202
    %v757 = vunpack.c.h.b16 %v202
    %v758 = vunpack.c.l.b16 %v203
    %v759 = vunpack.c.h.b16 %v203
    %v760 = vunpack.c.l.b16 %v204
    %v761 = vunpack.c.h.b16 %v204
    %v762 = vunpack.c.l.b16 %v205
    %v763 = vunpack.c.h.b16 %v205
    %v764 = vunpack.c.l.b16 %v206
    %v765 = vunpack.c.h.b16 %v206
    %v766 = vunpack.c.l.b16 %v207
    %v767 = vunpack.c.h.b16 %v207
    %v768 = vunpack.c.l.b16 %v208
    %v769 = vunpack.c.h.b16 %v208
    %v770 = vunpack.c.l.b16 %v209
    %v771 = vunpack.c.h.b16 %v209
    %v772 = vunpack.c.l.b16 %v210
    %v773 = vunpack.c.h.b16 %v210
    %v774 = vunpack.c.l.b16 %v211
    %v775 = vunpack.c.h.b16 %v211
    %v776 = vunpack.c.l.b16 %v212
    %v777 = vunpack.c.h.b16 %v212
    %v778 = vunpack.c.l.b16 %v213
    %v779 = vunpack.c.h.b16 %v213
    %v780 = vunpack.c.l.b16 %v214
    %v781 = vunpack.c.h.b16 %v214
    %v782 = vunpack.c.l.b16 %v215
    %v783 = vunpack.c.h.b16 %v215
    %v784 = vunpack.c.l.b16 %v216
    %v785 = vunpack.c.h.b16 %v216
    %v786 = vunpack.c.l.b16 %v217
    %v787 = vunpack.c.h.b16 %v217
    %v788 = vunpack.c.l.b16 %v218
    %v789 = vunpack.c.h.b16 %v218
    %v790 = vunpack.c.l.b16 %v219
    %v791 = vunpack.c.h.b16 %v219
    %v792 = vunpack.c.l.b16 %v220
    %v793 = vunpack.c.h.b16 %v220
    %v794 = vunpack.c.l.b16 %v221
    %v795 = vunpack.c.h.b16 %v221
    %v796 = vunpack.c.l.b16 %v222
    %v797 = vunpack.c.h.b16 %v222
    %v798 = vunpack.c.l.b16 %v223
    %v799 = vunpack.c.h.b16 %v223
    %v800 = vunpack.c.l.b16 %v224
    %v801 = vunpack.c.h.b16 %v224
    %v802 = vunpack.c.l.b16 %v225
    %v803 = vunpack.c.h.b16 %v225
    %v804 = vunpack.c.l.b16 %v226
    %v805 = vunpack.c.h.b16 %v226
    %v806 = vunpack.c.l.b16 %v227
    %v807 = vunpack.c.h.b16 %v227
    %v808 = vunpack.c.l.b16 %v228
    %v809 = vunpack.c.h.b16 %v228
    %v810 = vunpack.c.l.b16 %v229
    %v811 = vunpack.c.h.b16 %v229
    %v812 = vunpack.c.l.b16 %v230
    %v813 = vunpack.c.h.b16 %v230
    %v814 = vunpack.c.l.b16 %v231
    %v815 = vunpack.c.h.b16 %v231
    %v816 = vunpack.c.l.b16 %v232
    %v817 = vunpack.c.h.b16 %v232
    %v818 = vunpack.c.l.b16 %v233
    %v819 = vunpack.c.h.b16 %v233
    %v820 = vunpack.c.l.b16 %v234
    %v821 = vunpack.c.h.b16 %v234
    %v822 = vunpack.c.l.b16 %v235
    %v823 = vunpack.c.h.b16 %v235
    %v824 = vunpack.c.l.b16 %v236
    %v825 = vunpack.c.h.b16 %v236
    %v826 = vunpack.c.l.b16 %v237
    %v827 = vunpack.c.h.b16 %v237
    %v828 = vunpack.c.l.b16 %v238
    %v829 = vunpack.c.h.b16 %v238
    %v830 = vunpack.c.l.b16 %v239
    %v831 = vunpack.c.h.b16 %v239
    %v832 = vunpack.c.l.b16 %v240
    %v833 = vunpack.c.h.b16 %v240
    %v834 = vunpack.c.l.b16 %v241
    %v835 = vunpack.c.h.b16 %v241
    %v836 = vunpack.c.l.b16 %v242
    %v837 = vunpack.c.h.b16 %v242
    %v838 = vunpack.c.l.b16 %v243
    %v839 = vunpack.c.h.b16 %v243
    %v840 = vunpack.c.l.b16 %v244
    %v841 = vunpack.c.h.b16 %v244
    %v842 = vunpack.c.l.b16 %v245
    %v843 = vunpack.c.h.b16 %v245
    %v844 = vunpack.c.l.b16 %v246
    %v845 = vunpack.c.h.b16 %v246
    %v846 = vunpack.c.l.b16 %v247
    %v847 = vunpack.c.h.b16 %v247
    %v848 = vunpack.c.l.b16 %v248
    %v849 = vunpack.c.h.b16 %v248
    %v850 = vunpack.c.l.b16 %v249
    %v851 = vunpack.c.h.b16 %v249
    %v852 = vunpack.c.l.b16 %v250
    %v853 = vunpack.c.h.b16 %v250
    %v854 = vunpack.c.l.b16 %v251
    %v855 = vunpack.c.h.b16 %v251
    %v856 = vunpack.c.l.b16 %v252
    %v857 = vunpack.c.h.b16 %v252
    %v858 = vunpack.c.l.b16 %v253
    %v859 = vunpack.c.h.b16 %v253
    %v860 = vunpack.c.l.b16 %v254
    %v861 = vunpack.c.h.b16 %v254
    %v862 = vunpack.c.l.b16 %v255
    %v863 = vunpack.c.h.b16 %v255
    %v864 = vunpack.c.l.b16 %v256
    %v865 = vunpack.c.h.b16 %v256
    %v866 = vunpack.c.l.b16 %v257
    %v867 = vunpack.c.h.b16 %v257
    %v868 = vunpack.c.l.b16 %v258
    %v869 = vunpack.c.h.b16 %v258
    %v870 = vunpack.c.l.b16 %v259
    %v871 = vunpack.c.h.b16 %v259
    %v872 = vunpack.c.l.b16 %v260
    %v873 = vunpack.c.h.b16 %v260
    %v874 = vunpack.c.l.b16 %v261
    %v875 = vunpack.c.h.b16 %v261
    %v876 = vunpack.c.l.b16 %v262
    %v877 = vunpack.c.h.b16 %v262
    %v878 = vunpack.c.l.b16 %v263
    %v879 = vunpack.c.h.b16 %v263
    %v880 = vunpack.c.l.b16 %v264
    %v881 = vunpack.c.h.b16 %v264
    %v882 = vunpack.c.l.b16 %v265
    %v883 = vunpack.c.h.b16 %v265
    %v884 = vunpack.c.l.b16 %v266
    %v885 = vunpack.c.h.b16 %v266
    %v886 = vpack.c.b16 %v506, %v502
    %v887 = vpack.c.b16 %v507, %v503
    %v888 = vpack.c.b16 %v508, %v504
    %v889 = vpack.c.b16 %v509, %v505
    %v890 = vpack.c.b16 %v514, %v510
    %v891 = vpack.c.b16 %v515, %v511
    %v892 = vpack.c.b16 %v516, %v512
    %v893 = vpack.c.b16 %v517, %v513
    %v894 = vpack.c.b16 %v522, %v518
    %v895 = vpack.c.b16 %v523, %v519
    %v896 = vpack.c.b16 %v524, %v520
    %v897 = vpack.c.b16 %v525, %v521
    %v898 = vpack.c.b16 %v530, %v526
    %v899 = vpack.c.b16 %v531, %v527
    %v900 = vpack.c.b16 %v532, %v528
    %v901 = vpack.c.b16 %v533, %v529
    %v902 = vpack.c.b16 %v538, %v534
    %v903 = vpack.c.b16 %v539, %v535
    %v904 = vpack.c.b16 %v540, %v536
    %v905 = vpack.c.b16 %v541, %v537
    %v906 = vpack.c.b16 %v546, %v542
    %v907 = vpack.c.b16 %v547, %v543
    %v908 = vpack.c.b16 %v548, %v544
    %v909 = vpack.c.b16 %v549, %v545
    %v910 = vpack.c.b16 %v554, %v550
    %v911 = vpack.c.b16 %v555, %v551
    %v912 = vpack.c.b16 %v556, %v552
    %v913 = vpack.c.b16 %v557, %v553
    %v914 = vpack.c.b16 %v562, %v558
    %v915 = vpack.c.b16 %v563, %v559
    %v916 = vpack.c.b16 %v564, %v560
    %v917 = vpack.c.b16 %v565, %v561
    %v918 = vpack.c.b16 %v570, %v566
    %v919 = vpack.c.b16 %v571, %v567
    %v920 = vpack.c.b16 %v572, %v568
    %v921 = vpack.c.b16 %v573, %v569
    %v922 = vpack.c.b16 %v578, %v574
    %v923 = vpack.c.b16 %v579, %v575
    %v924 = vpack.c.b16 %v580, %v576
    %v925 = vpack.c.b16 %v581, %v577
    %v926 = vpack.c.b16 %v586, %v582
    %v927 = vpack.c.b16 %v587, %v583
    %v928 = vpack.c.b16 %v588, %v584
    %v929 = vpack.c.b16 %v589, %v585
    %v930 = vpack.c.b16 %v594, %v590
    %v931 = vpack.c.b16 %v595, %v591
    %v932 = vpack.c.b16 %v596, %v592
    %v933 = vpack.c.b16 %v597, %v593
    %v934 = vpack.c.b16 %v602, %v598
    %v935 = vpack.c.b16 %v603, %v599
    %v936 = vpack.c.b16 %v604, %v600
    %v937 = vpack.c.b16 %v605, %v601
    %v938 = vpack.c.b16 %v610, %v606
    %v939 = vpack.c.b16 %v611, %v607
    %v940 = vpack.c.b16 %v612, %v608
    %v941 = vpack.c.b16 %v613, %v609
    %v942 = vpack.c.b16 %v618, %v614
    %v943 = vpack.c.b16 %v619, %v615
    %v944 = vpack.c.b16 %v620, %v616
    %v945 = vpack.c.b16 %v621, %v617
    %v946 = vpack.c.b16 %v626, %v622
    %v947 = vpack.c.b16 %v627, %v623
    %v948 = vpack.c.b16 %v628, %v624
    %v949 = vpack.c.b16 %v629, %v625
    %v950 = vpack.c.b16 %v634, %v630
    %v951 = vpack.c.b16 %v635, %v631
    %v952 = vpack.c.b16 %v636, %v632
    %v953 = vpack.c.b16 %v637, %v633
    %v954 = vpack.c.b16 %v642, %v638
    %v955 = vpack.c.b16 %v643, %v639
    %v956 = vpack.c.b16 %v644, %v640
    %v957 = vpack.c.b16 %v645, %v641
    %v958 = vpack.c.b16 %v650, %v646
    %v959 = vpack.c.b16 %v651, %v647
    %v960 = vpack.c.b16 %v652, %v648
    %v961 = vpack.c.b16 %v653, %v649
    %v962 = vpack.c.b16 %v658, %v654
    %v963 = vpack.c.b16 %v659, %v655
    %v964 = vpack.c.b16 %v660, %v656
    %v965 = vpack.c.b16 %v661, %v657
    %v966 = vpack.c.b16 %v666, %v662
    %v967 = vpack.c.b16 %v667, %v663
    %v968 = vpack.c.b16 %v668, %v664
    %v969 = vpack.c.b16 %v669, %v665
    %v970 = vpack.c.b16 %v674, %v670
    %v971 = vpack.c.b16 %v675, %v671
    %v972 = vpack.c.b16 %v676, %v672
    %v973 = vpack.c.b16 %v677, %v673
    %v974 = vpack.c.b16 %v682, %v678
    %v975 = vpack.c.b16 %v683, %v679
    %v976 = vpack.c.b16 %v684, %v680
    %v977 = vpack.c.b16 %v685, %v681
    %v978 = vpack.c.b16 %v690, %v686
    %v979 = vpack.c.b16 %v691, %v687
    %v980 = vpack.c.b16 %v692, %v688
    %v981 = vpack.c.b16 %v693, %v689
    %v982 = vpack.c.b16 %v698, %v694
    %v983 = vpack.c.b16 %v699, %v695
    %v984 = vpack.c.b16 %v700, %v696
    %v985 = vpack.c.b16 %v701, %v697
    %v986 = vpack.c.b16 %v706, %v702
    %v987 = vpack.c.b16 %v707, %v703
    %v988 = vpack.c.b16 %v708, %v704
    %v989 = vpack.c.b16 %v709, %v705
    %v990 = vpack.c.b16 %v714, %v710
    %v991 = vpack.c.b16 %v715, %v711
    %v992 = vpack.c.b16 %v716, %v712
    %v993 = vpack.c.b16 %v717, %v713
    %v994 = vpack.c.b16 %v722, %v718
    %v995 = vpack.c.b16 %v723, %v719
    %v996 = vpack.c.b16 %v724, %v720
    %v997 = vpack.c.b16 %v725, %v721
    %v998 = vpack.c.b16 %v730, %v726
    %v999 = vpack.c.b16 %v731, %v727
    %v1000 = vpack.c.b16 %v732, %v728
    %v1001 = vpack.c.b16 %v733, %v729
    %v1002 = vpack.c.b16 %v738, %v734
    %v1003 = vpack.c.b16 %v739, %v735
    %v1004 = vpack.c.b16 %v740, %v736
    %v1005 = vpack.c.b16 %v741, %v737
    %v1006 = vpack.c.b16 %v746, %v742
    %v1007 = vpack.c.b16 %v747, %v743
    %v1008 = vpack.c.b16 %v748, %v744
    %v1009 = vpack.c.b16 %v749, %v745
    %v1010 = vpack.c.b16 %v754, %v750
    %v1011 = vpack.c.b16 %v755, %v751
    %v1012 = vpack.c.b16 %v756, %v752
    %v1013 = vpack.c.b16 %v757, %v753
    %v1014 = vpack.c.b16 %v762, %v758
    %v1015 = vpack.c.b16 %v763, %v759
    %v1016 = vpack.c.b16 %v764, %v760
    %v1017 = vpack.c.b16 %v765, %v761
    %v1018 = vpack.c.b16 %v770, %v766
    %v1019 = vpack.c.b16 %v771, %v767
    %v1020 = vpack.c.b16 %v772, %v768
    %v1021 = vpack.c.b16 %v773, %v769
    %v1022 = vpack.c.b16 %v778, %v774
    %v1023 = vpack.c.b16 %v779, %v775
    %v1024 = vpack.c.b16 %v780, %v776
    %v1025 = vpack.c.b16 %v781, %v777
    %v1026 = vpack.c.b16 %v786, %v782
    %v1027 = vpack.c.b16 %v787, %v783
    %v1028 = vpack.c.b16 %v788, %v784
    %v1029 = vpack.c.b16 %v789, %v785
    %v1030 = vpack.c.b16 %v794, %v790
    %v1031 = vpack.c.b16 %v795, %v791
    %v1032 = vpack.c.b16 %v796, %v792
    %v1033 = vpack.c.b16 %v797, %v793
    %v1034 = vpack.c.b16 %v802, %v798
    %v1035 = vpack.c.b16 %v803, %v799
    %v1036 = vpack.c.b16 %v804, %v800
    %v1037 = vpack.c.b16 %v805, %v801
    %v1038 = vpack.c.b16 %v810, %v806
    %v1039 = vpack.c.b16 %v811, %v807
    %v1040 = vpack.c.b16 %v812, %v808
    %v1041 = vpack.c.b16 %v813, %v809
    %v1042 = vpack.c.b16 %v818, %v814
    %v1043 = vpack.c.b16 %v819, %v815
    %v1044 = vpack.c.b16 %v820, %v816
    %v1045 = vpack.c.b16 %v821, %v817
    %v1046 = vpack.c.b16 %v826, %v822
    %v1047 = vpack.c.b16 %v827, %v823
    %v1048 = vpack.c.b16 %v828, %v824
    %v1049 = vpack.c.b16 %v829, %v825
    %v1050 = vpack.c.b16 %v834, %v830
    %v1051 = vpack.c.b16 %v835, %v831
    %v1052 = vpack.c.b16 %v836, %v832
    %v1053 = vpack.c.b16 %v837, %v833
    %v1054 = vpack.c.b16 %v842, %v838
    %v1055 = vpack.c.b16 %v843, %v839
    %v1056 = vpack.c.b16 %v844, %v840
    %v1057 = vpack.c.b16 %v845, %v841
    %v1058 = vpack.c.b16 %v850, %v846
    %v1059 = vpack.c.b16 %v851, %v847
    %v1060 = vpack.c.b16 %v852, %v848
    %v1061 = vpack.c.b16 %v853, %v849
    %v1062 = vpack.c.b16 %v858, %v854
    %v1063 = vpack.c.b16 %v859, %v855
    %v1064 = vpack.c.b16 %v860, %v856
    %v1065 = vpack.c.b16 %v861, %v857
    %v1066 = vpack.c.b16 %v866, %v862
    %v1067 = vpack.c.b16 %v867, %v863
    %v1068 = vpack.c.b16 %v868, %v864
    %v1069 = vpack.c.b16 %v869, %v865
    %v1070 = vpack.c.b16 %v874, %v870
    %v1071 = vpack.c.b16 %v875, %v871
    %v1072 = vpack.c.b16 %v876, %v872
    %v1073 = vpack.c.b16 %v877, %v873
    %v1074 = vpack.c.b16 %v882, %v878
    %v1075 = vpack.c.b16 %v883, %v879
    %v1076 = vpack.c.b16 %v884, %v880
    %v1077 = vpack.c.b16 %v885, %v881
    %1270 = vmatprep.subr.bf16.mxu0 %v915
    %1271 = vmatpush1.bf16.msra.mxu0 %v914
    %1272 = vmatprep.subr.bf16.mxu0 %v911
    %1273 = vmatpush1.bf16.msra.mxu0 %v910
    %1274 = vmatprep.subr.bf16.mxu0 %v907
    %1275 = vmatpush1.bf16.msra.mxu0 %v906
    %1276 = vmatprep.subr.bf16.mxu0 %v903
    %1277 = vmatpush1.bf16.msra.mxu0 %v902
    %1278 = vmatprep.subr.bf16.mxu0 %v899
    %1279 = vmatpush1.bf16.msra.mxu0 %v898
    %1280 = vmatprep.subr.bf16.mxu0 %v895
    %1281 = vmatpush1.bf16.msra.mxu0 %v894
    %1282 = vmatprep.subr.bf16.mxu0 %v891
    %1283 = vmatpush1.bf16.msra.mxu0 %v890
    %1284 = vmatprep.subr.bf16.mxu0 %v887
    %1285 = vmatpush1.bf16.msra.mxu0 %v886
    %1286 = vmatprep.subr.bf16.mxu0 %v947
    %1287 = vmatpush2.bf16.msra.mxu0 %v946
    %1288 = vmatprep.subr.bf16.mxu0 %v943
    %1289 = vmatpush2.bf16.msra.mxu0 %v942
    %1290 = vmatprep.subr.bf16.mxu0 %v939
    %1291 = vmatpush2.bf16.msra.mxu0 %v938
    %1292 = vmatprep.subr.bf16.mxu0 %v935
    %1293 = vmatpush2.bf16.msra.mxu0 %v934
    %1294 = vmatprep.subr.bf16.mxu0 %v931
    %1295 = vmatpush2.bf16.msra.mxu0 %v930
    %1296 = vmatprep.subr.bf16.mxu0 %v927
    %1297 = vmatpush2.bf16.msra.mxu0 %v926
    %1298 = vmatprep.subr.bf16.mxu0 %v923
    %1299 = vmatpush2.bf16.msra.mxu0 %v922
    %1300 = vmatprep.subr.bf16.mxu0 %v919
    %1301 = vmatpush2.bf16.msra.mxu0 %v918
    %1302 = vmatprep.mubr.bf16.mxu0 %v299
    %1303 = vmatmul.mubr.bf16.gmra.mxu0 %v298
    %v1304 = vpop.f32.mrf.mxu0
    %v1305 = vadd.f32 %v272, %v1304
    %v1306 = vpop.f32.mrf.mxu0
    %v1307 = vadd.f32 %v276, %v1306
    %v1308 = vpop.f32.mrf.mxu0
    %v1309 = vpop.f32.mrf.mxu0
    %1310 = vdwg.mxu0
    %1311 = vmatprep.subr.bf16.mxu0 %v979
    %1312 = vmatpush1.bf16.msra.mxu0 %v978
    %1313 = vmatprep.subr.bf16.mxu0 %v975
    %1314 = vmatpush1.bf16.msra.mxu0 %v974
    %1315 = vmatprep.subr.bf16.mxu0 %v971
    %1316 = vmatpush1.bf16.msra.mxu0 %v970
    %1317 = vmatprep.subr.bf16.mxu0 %v967
    %1318 = vmatpush1.bf16.msra.mxu0 %v966
    %1319 = vmatprep.subr.bf16.mxu0 %v963
    %1320 = vmatpush1.bf16.msra.mxu0 %v962
    %1321 = vmatprep.subr.bf16.mxu0 %v959
    %1322 = vmatpush1.bf16.msra.mxu0 %v958
    %1323 = vmatprep.subr.bf16.mxu0 %v955
    %1324 = vmatpush1.bf16.msra.mxu0 %v954
    %1325 = vmatprep.subr.bf16.mxu0 %v951
    %1326 = vmatpush1.bf16.msra.mxu0 %v950
    %1327 = vmatprep.subr.bf16.mxu0 %v1011
    %1328 = vmatpush2.bf16.msra.mxu0 %v1010
    %1329 = vmatprep.subr.bf16.mxu0 %v1007
    %1330 = vmatpush2.bf16.msra.mxu0 %v1006
    %1331 = vmatprep.subr.bf16.mxu0 %v1003
    %1332 = vmatpush2.bf16.msra.mxu0 %v1002
    %1333 = vmatprep.subr.bf16.mxu0 %v999
    %1334 = vmatpush2.bf16.msra.mxu0 %v998
    %1335 = vmatprep.subr.bf16.mxu0 %v995
    %1336 = vmatpush2.bf16.msra.mxu0 %v994
    %1337 = vmatprep.subr.bf16.mxu0 %v991
    %1338 = vmatpush2.bf16.msra.mxu0 %v990
    %1339 = vmatprep.subr.bf16.mxu0 %v987
    %1340 = vmatpush2.bf16.msra.mxu0 %v986
    %1341 = vmatprep.subr.bf16.mxu0 %v983
    %1342 = vmatpush2.bf16.msra.mxu0 %v982
    %1343 = vmatprep.mubr.bf16.mxu0 %v301
    %1344 = vmatmul.mubr.bf16.gmra.mxu0 %v300
    %v1345 = vpop.f32.mrf.mxu0
    %v1346 = vadd.f32 %v1305, %v1345
    %v1347 = vpop.f32.mrf.mxu0
    %v1348 = vadd.f32 %v1307, %v1347
    %v1349 = vpop.f32.mrf.mxu0
    %v1350 = vpop.f32.mrf.mxu0
    %1351 = vdwg.mxu0
    %1352 = vmatprep.subr.bf16.mxu0 %v1043
    %1353 = vmatpush1.bf16.msra.mxu0 %v1042
    %1354 = vmatprep.subr.bf16.mxu0 %v1039
    %1355 = vmatpush1.bf16.msra.mxu0 %v1038
    %1356 = vmatprep.subr.bf16.mxu0 %v1035
    %1357 = vmatpush1.bf16.msra.mxu0 %v1034
    %1358 = vmatprep.subr.bf16.mxu0 %v1031
    %1359 = vmatpush1.bf16.msra.mxu0 %v1030
    %1360 = vmatprep.subr.bf16.mxu0 %v1027
    %1361 = vmatpush1.bf16.msra.mxu0 %v1026
    %1362 = vmatprep.subr.bf16.mxu0 %v1023
    %1363 = vmatpush1.bf16.msra.mxu0 %v1022
    %1364 = vmatprep.subr.bf16.mxu0 %v1019
    %1365 = vmatpush1.bf16.msra.mxu0 %v1018
    %1366 = vmatprep.subr.bf16.mxu0 %v1015
    %1367 = vmatpush1.bf16.msra.mxu0 %v1014
    %1368 = vmatprep.subr.bf16.mxu0 %v1075
    %1369 = vmatpush2.bf16.msra.mxu0 %v1074
    %1370 = vmatprep.subr.bf16.mxu0 %v1071
    %1371 = vmatpush2.bf16.msra.mxu0 %v1070
    %1372 = vmatprep.subr.bf16.mxu0 %v1067
    %1373 = vmatpush2.bf16.msra.mxu0 %v1066
    %1374 = vmatprep.subr.bf16.mxu0 %v1063
    %1375 = vmatpush2.bf16.msra.mxu0 %v1062
    %1376 = vmatprep.subr.bf16.mxu0 %v1059
    %1377 = vmatpush2.bf16.msra.mxu0 %v1058
    %1378 = vmatprep.subr.bf16.mxu0 %v1055
    %1379 = vmatpush2.bf16.msra.mxu0 %v1054
    %1380 = vmatprep.subr.bf16.mxu0 %v1051
    %1381 = vmatpush2.bf16.msra.mxu0 %v1050
    %1382 = vmatprep.subr.bf16.mxu0 %v1047
    %1383 = vmatpush2.bf16.msra.mxu0 %v1046
    %1384 = vmatprep.mubr.bf16.mxu0 %v303
    %1385 = vmatmul.mubr.bf16.gmra.mxu0 %v302
    %v1386 = vpop.f32.mrf.mxu0
    %v1387 = vadd.f32 %v1346, %v1386
    %v1388 = vpop.f32.mrf.mxu0
    %v1389 = vadd.f32 %v1348, %v1388
    %v1390 = vpop.f32.mrf.mxu0
    %v1391 = vpop.f32.mrf.mxu0
    %1392 = vdwg.mxu0
    %1393 = vmatprep.subr.bf16.mxu0 %v917
    %1394 = vmatpush1.bf16.msra.mxu0 %v916
    %1395 = vmatprep.subr.bf16.mxu0 %v913
    %1396 = vmatpush1.bf16.msra.mxu0 %v912
    %1397 = vmatprep.subr.bf16.mxu0 %v909
    %1398 = vmatpush1.bf16.msra.mxu0 %v908
    %1399 = vmatprep.subr.bf16.mxu0 %v905
    %1400 = vmatpush1.bf16.msra.mxu0 %v904
    %1401 = vmatprep.subr.bf16.mxu0 %v901
    %1402 = vmatpush1.bf16.msra.mxu0 %v900
    %1403 = vmatprep.subr.bf16.mxu0 %v897
    %1404 = vmatpush1.bf16.msra.mxu0 %v896
    %1405 = vmatprep.subr.bf16.mxu0 %v893
    %1406 = vmatpush1.bf16.msra.mxu0 %v892
    %1407 = vmatprep.subr.bf16.mxu0 %v889
    %1408 = vmatpush1.bf16.msra.mxu0 %v888
    %1409 = vmatprep.subr.bf16.mxu0 %v949
    %1410 = vmatpush2.bf16.msra.mxu0 %v948
    %1411 = vmatprep.subr.bf16.mxu0 %v945
    %1412 = vmatpush2.bf16.msra.mxu0 %v944
    %1413 = vmatprep.subr.bf16.mxu0 %v941
    %1414 = vmatpush2.bf16.msra.mxu0 %v940
    %1415 = vmatprep.subr.bf16.mxu0 %v937
    %1416 = vmatpush2.bf16.msra.mxu0 %v936
    %1417 = vmatprep.subr.bf16.mxu0 %v933
    %1418 = vmatpush2.bf16.msra.mxu0 %v932
    %1419 = vmatprep.subr.bf16.mxu0 %v929
    %1420 = vmatpush2.bf16.msra.mxu0 %v928
    %1421 = vmatprep.subr.bf16.mxu0 %v925
    %1422 = vmatpush2.bf16.msra.mxu0 %v924
    %1423 = vmatprep.subr.bf16.mxu0 %v921
    %1424 = vmatpush2.bf16.msra.mxu0 %v920
    %1425 = vmatprep.mubr.bf16.mxu0 %v299
    %1426 = vmatmul.mubr.bf16.gmra.mxu0 %v298
    %v1427 = vpop.f32.mrf.mxu0
    %v1428 = vadd.f32 %v280, %v1427
    %v1429 = vpop.f32.mrf.mxu0
    %v1430 = vadd.f32 %v284, %v1429
    %v1431 = vpop.f32.mrf.mxu0
    %v1432 = vpop.f32.mrf.mxu0
    %1433 = vdwg.mxu0
    %1434 = vmatprep.subr.bf16.mxu0 %v981
    %1435 = vmatpush1.bf16.msra.mxu0 %v980
    %1436 = vmatprep.subr.bf16.mxu0 %v977
    %1437 = vmatpush1.bf16.msra.mxu0 %v976
    %1438 = vmatprep.subr.bf16.mxu0 %v973
    %1439 = vmatpush1.bf16.msra.mxu0 %v972
    %1440 = vmatprep.subr.bf16.mxu0 %v969
    %1441 = vmatpush1.bf16.msra.mxu0 %v968
    %1442 = vmatprep.subr.bf16.mxu0 %v965
    %1443 = vmatpush1.bf16.msra.mxu0 %v964
    %1444 = vmatprep.subr.bf16.mxu0 %v961
    %1445 = vmatpush1.bf16.msra.mxu0 %v960
    %1446 = vmatprep.subr.bf16.mxu0 %v957
    %1447 = vmatpush1.bf16.msra.mxu0 %v956
    %1448 = vmatprep.subr.bf16.mxu0 %v953
    %1449 = vmatpush1.bf16.msra.mxu0 %v952
    %1450 = vmatprep.subr.bf16.mxu0 %v1013
    %1451 = vmatpush2.bf16.msra.mxu0 %v1012
    %1452 = vmatprep.subr.bf16.mxu0 %v1009
    %1453 = vmatpush2.bf16.msra.mxu0 %v1008
    %1454 = vmatprep.subr.bf16.mxu0 %v1005
    %1455 = vmatpush2.bf16.msra.mxu0 %v1004
    %1456 = vmatprep.subr.bf16.mxu0 %v1001
    %1457 = vmatpush2.bf16.msra.mxu0 %v1000
    %1458 = vmatprep.subr.bf16.mxu0 %v997
    %1459 = vmatpush2.bf16.msra.mxu0 %v996
    %1460 = vmatprep.subr.bf16.mxu0 %v993
    %1461 = vmatpush2.bf16.msra.mxu0 %v992
    %1462 = vmatprep.subr.bf16.mxu0 %v989
    %1463 = vmatpush2.bf16.msra.mxu0 %v988
    %1464 = vmatprep.subr.bf16.mxu0 %v985
    %1465 = vmatpush2.bf16.msra.mxu0 %v984
    %1466 = vmatprep.mubr.bf16.mxu0 %v301
    %1467 = vmatmul.mubr.bf16.gmra.mxu0 %v300
    %v1468 = vpop.f32.mrf.mxu0
    %v1469 = vadd.f32 %v1428, %v1468
    %v1470 = vpop.f32.mrf.mxu0
    %v1471 = vadd.f32 %v1430, %v1470
    %v1472 = vpop.f32.mrf.mxu0
    %v1473 = vpop.f32.mrf.mxu0
    %1474 = vdwg.mxu0
    %1475 = vmatprep.subr.bf16.mxu0 %v1045
    %1476 = vmatpush1.bf16.msra.mxu0 %v1044
    %1477 = vmatprep.subr.bf16.mxu0 %v1041
    %1478 = vmatpush1.bf16.msra.mxu0 %v1040
    %1479 = vmatprep.subr.bf16.mxu0 %v1037
    %1480 = vmatpush1.bf16.msra.mxu0 %v1036
    %1481 = vmatprep.subr.bf16.mxu0 %v1033
    %1482 = vmatpush1.bf16.msra.mxu0 %v1032
    %1483 = vmatprep.subr.bf16.mxu0 %v1029
    %1484 = vmatpush1.bf16.msra.mxu0 %v1028
    %1485 = vmatprep.subr.bf16.mxu0 %v1025
    %1486 = vmatpush1.bf16.msra.mxu0 %v1024
    %1487 = vmatprep.subr.bf16.mxu0 %v1021
    %1488 = vmatpush1.bf16.msra.mxu0 %v1020
    %1489 = vmatprep.subr.bf16.mxu0 %v1017
    %1490 = vmatpush1.bf16.msra.mxu0 %v1016
    %1491 = vmatprep.subr.bf16.mxu0 %v1077
    %1492 = vmatpush2.bf16.msra.mxu0 %v1076
    %1493 = vmatprep.subr.bf16.mxu0 %v1073
    %1494 = vmatpush2.bf16.msra.mxu0 %v1072
    %1495 = vmatprep.subr.bf16.mxu0 %v1069
    %1496 = vmatpush2.bf16.msra.mxu0 %v1068
    %1497 = vmatprep.subr.bf16.mxu0 %v1065
    %1498 = vmatpush2.bf16.msra.mxu0 %v1064
    %1499 = vmatprep.subr.bf16.mxu0 %v1061
    %1500 = vmatpush2.bf16.msra.mxu0 %v1060
    %1501 = vmatprep.subr.bf16.mxu0 %v1057
    %1502 = vmatpush2.bf16.msra.mxu0 %v1056
    %1503 = vmatprep.subr.bf16.mxu0 %v1053
    %1504 = vmatpush2.bf16.msra.mxu0 %v1052
    %1505 = vmatprep.subr.bf16.mxu0 %v1049
    %1506 = vmatpush2.bf16.msra.mxu0 %v1048
    %1507 = vmatprep.mubr.bf16.mxu0 %v303
    %1508 = vmatmul.mubr.bf16.gmra.mxu0 %v302
    %v1509 = vpop.f32.mrf.mxu0
    %v1510 = vadd.f32 %v1469, %v1509
    %v1511 = vpop.f32.mrf.mxu0
    %v1512 = vadd.f32 %v1471, %v1511
    %v1513 = vpop.f32.mrf.mxu0
    %v1514 = vpop.f32.mrf.mxu0
    %1515 = vdwg.mxu0
    %v1516 = vmax.f32 %v1387, 0.0
    %v1517 = vmax.f32 %v1389, 0.0
    %v1518 = vmax.f32 %v1510, 0.0
    %v1519 = vmax.f32 %v1512, 0.0
    %v1520 = vld [vmem:[#allocation8] sm:$0xff]
    %v1521 = vld [vmem:[#allocation8 + $0x8] sm:$0xff]
    %v1522 = vld [vmem:[#allocation8 + $0x10] sm:$0xff]
    %v1523 = vld [vmem:[#allocation8 + $0x18] sm:$0xff]
    %v1524 = vld [vmem:[#allocation8 + $0x20] sm:$0xff]
    %v1525 = vld [vmem:[#allocation8 + $0x28] sm:$0xff]
    %v1526 = vld [vmem:[#allocation8 + $0x30] sm:$0xff]
    %v1527 = vld [vmem:[#allocation8 + $0x38] sm:$0xff]
    %v1528 = vld [vmem:[#allocation8 + $0x40] sm:$0xff]
    %v1529 = vld [vmem:[#allocation8 + $0x48] sm:$0xff]
    %v1530 = vld [vmem:[#allocation8 + $0x50] sm:$0xff]
    %v1531 = vld [vmem:[#allocation8 + $0x58] sm:$0xff]
    %v1532 = vld [vmem:[#allocation8 + $0x60] sm:$0xff]
    %v1533 = vld [vmem:[#allocation8 + $0x68] sm:$0xff]
    %v1534 = vld [vmem:[#allocation8 + $0x70] sm:$0xff]
    %v1535 = vld [vmem:[#allocation8 + $0x78] sm:$0xff]
    %v1536 = vld [vmem:[#allocation8 + $0x80] sm:$0xff]
    %v1537 = vld [vmem:[#allocation8 + $0x88] sm:$0xff]
    %v1538 = vld [vmem:[#allocation8 + $0x90] sm:$0xff]
    %v1539 = vld [vmem:[#allocation8 + $0x98] sm:$0xff]
    %v1540 = vld [vmem:[#allocation8 + $0xa0] sm:$0xff]
    %v1541 = vld [vmem:[#allocation8 + $0xa8] sm:$0xff]
    %v1542 = vld [vmem:[#allocation8 + $0xb0] sm:$0xff]
    %v1543 = vld [vmem:[#allocation8 + $0xb8] sm:$0xff]
    %v1544 = vld [vmem:[#allocation8 + $0xc0] sm:$0xff]
    %v1545 = vld [vmem:[#allocation8 + $0xc8] sm:$0xff]
    %v1546 = vld [vmem:[#allocation8 + $0xd0] sm:$0xff]
    %v1547 = vld [vmem:[#allocation8 + $0xd8] sm:$0xff]
    %v1548 = vld [vmem:[#allocation8 + $0xe0] sm:$0xff]
    %v1549 = vld [vmem:[#allocation8 + $0xe8] sm:$0xff]
    %v1550 = vld [vmem:[#allocation8 + $0xf0] sm:$0xff]
    %v1551 = vld [vmem:[#allocation8 + $0xf8] sm:$0xff]
    %v1552 = vld [vmem:[#allocation8 + $0x100] sm:$0xff]
    %v1553 = vld [vmem:[#allocation8 + $0x108] sm:$0xff]
    %v1554 = vld [vmem:[#allocation8 + $0x110] sm:$0xff]
    %v1555 = vld [vmem:[#allocation8 + $0x118] sm:$0xff]
    %v1556 = vld [vmem:[#allocation8 + $0x120] sm:$0xff]
    %v1557 = vld [vmem:[#allocation8 + $0x128] sm:$0xff]
    %v1558 = vld [vmem:[#allocation8 + $0x130] sm:$0xff]
    %v1559 = vld [vmem:[#allocation8 + $0x138] sm:$0xff]
    %v1560 = vld [vmem:[#allocation8 + $0x140] sm:$0xff]
    %v1561 = vld [vmem:[#allocation8 + $0x148] sm:$0xff]
    %v1562 = vld [vmem:[#allocation8 + $0x150] sm:$0xff]
    %v1563 = vld [vmem:[#allocation8 + $0x158] sm:$0xff]
    %v1564 = vld [vmem:[#allocation8 + $0x160] sm:$0xff]
    %v1565 = vld [vmem:[#allocation8 + $0x168] sm:$0xff]
    %v1566 = vld [vmem:[#allocation8 + $0x170] sm:$0xff]
    %v1567 = vld [vmem:[#allocation8 + $0x178] sm:$0xff]
    %v1568 = vld [vmem:[#allocation8 + $0x180] sm:$0xff]
    %v1569 = vld [vmem:[#allocation8 + $0x188] sm:$0xff]
    %v1570 = vld [vmem:[#allocation8 + $0x190] sm:$0xff]
    %v1571 = vld [vmem:[#allocation8 + $0x198] sm:$0xff]
    %v1572 = vld [vmem:[#allocation8 + $0x1a0] sm:$0xff]
    %v1573 = vld [vmem:[#allocation8 + $0x1a8] sm:$0xff]
    %v1574 = vld [vmem:[#allocation8 + $0x1b0] sm:$0xff]
    %v1575 = vld [vmem:[#allocation8 + $0x1b8] sm:$0xff]
    %v1576 = vld [vmem:[#allocation8 + $0x1c0] sm:$0xff]
    %v1577 = vld [vmem:[#allocation8 + $0x1c8] sm:$0xff]
    %v1578 = vld [vmem:[#allocation8 + $0x1d0] sm:$0xff]
    %v1579 = vld [vmem:[#allocation8 + $0x1d8] sm:$0xff]
    %v1580 = vld [vmem:[#allocation8 + $0x1e0] sm:$0xff]
    %v1581 = vld [vmem:[#allocation8 + $0x1e8] sm:$0xff]
    %v1582 = vld [vmem:[#allocation8 + $0x1f0] sm:$0xff]
    %v1583 = vld [vmem:[#allocation8 + $0x1f8] sm:$0xff]
    %v1584 = vld [vmem:[%s4] sm:$0x1]
    %v1586 = vlaneseq
    %v1587 = vshrl.u32 %v1586, 7
    %v1588 = vsub.s32 0, %v1587
    %v1589 = vrot.slane %v1584, %v1588
    %1591 = vmatprep.subr.mxu0 0.0
    %1592 = vmatpush1.msra.mxu0 %v1535
    %1593 = vmatprep.subr.mxu0 0.0
    %1594 = vmatpush1.msra.mxu0 %v1534
    %1595 = vmatprep.subr.mxu0 0.0
    %1596 = vmatpush1.msra.mxu0 %v1533
    %1597 = vmatprep.subr.mxu0 0.0
    %1598 = vmatpush1.msra.mxu0 %v1532
    %1599 = vmatprep.subr.mxu0 0.0
    %1600 = vmatpush1.msra.mxu0 %v1531
    %1601 = vmatprep.subr.mxu0 0.0
    %1602 = vmatpush1.msra.mxu0 %v1530
    %1603 = vmatprep.subr.mxu0 0.0
    %1604 = vmatpush1.msra.mxu0 %v1529
    %1605 = vmatprep.subr.mxu0 0.0
    %1606 = vmatpush1.msra.mxu0 %v1528
    %1607 = vmatprep.subr.mxu0 0.0
    %1608 = vmatpush1.msra.mxu0 %v1527
    %1609 = vmatprep.subr.mxu0 0.0
    %1610 = vmatpush1.msra.mxu0 %v1526
    %1611 = vmatprep.subr.mxu0 0.0
    %1612 = vmatpush1.msra.mxu0 %v1525
    %1613 = vmatprep.subr.mxu0 0.0
    %1614 = vmatpush1.msra.mxu0 %v1524
    %1615 = vmatprep.subr.mxu0 0.0
    %1616 = vmatpush1.msra.mxu0 %v1523
    %1617 = vmatprep.subr.mxu0 0.0
    %1618 = vmatpush1.msra.mxu0 %v1522
    %1619 = vmatprep.subr.mxu0 0.0
    %1620 = vmatpush1.msra.mxu0 %v1521
    %1621 = vmatprep.subr.mxu0 0.0
    %1622 = vmatpush1.msra.mxu0 %v1520
    %1623 = vmatprep.subr.mxu0 0.0
    %1624 = vmatpush2.msra.mxu0 %v1551
    %1625 = vmatprep.subr.mxu0 0.0
    %1626 = vmatpush2.msra.mxu0 %v1550
    %1627 = vmatprep.subr.mxu0 0.0
    %1628 = vmatpush2.msra.mxu0 %v1549
    %1629 = vmatprep.subr.mxu0 0.0
    %1630 = vmatpush2.msra.mxu0 %v1548
    %1631 = vmatprep.subr.mxu0 0.0
    %1632 = vmatpush2.msra.mxu0 %v1547
    %1633 = vmatprep.subr.mxu0 0.0
    %1634 = vmatpush2.msra.mxu0 %v1546
    %1635 = vmatprep.subr.mxu0 0.0
    %1636 = vmatpush2.msra.mxu0 %v1545
    %1637 = vmatprep.subr.mxu0 0.0
    %1638 = vmatpush2.msra.mxu0 %v1544
    %1639 = vmatprep.subr.mxu0 0.0
    %1640 = vmatpush2.msra.mxu0 %v1543
    %1641 = vmatprep.subr.mxu0 0.0
    %1642 = vmatpush2.msra.mxu0 %v1542
    %1643 = vmatprep.subr.mxu0 0.0
    %1644 = vmatpush2.msra.mxu0 %v1541
    %1645 = vmatprep.subr.mxu0 0.0
    %1646 = vmatpush2.msra.mxu0 %v1540
    %1647 = vmatprep.subr.mxu0 0.0
    %1648 = vmatpush2.msra.mxu0 %v1539
    %1649 = vmatprep.subr.mxu0 0.0
    %1650 = vmatpush2.msra.mxu0 %v1538
    %1651 = vmatprep.subr.mxu0 0.0
    %1652 = vmatpush2.msra.mxu0 %v1537
    %1653 = vmatprep.subr.mxu0 0.0
    %1654 = vmatpush2.msra.mxu0 %v1536
    %1655 = vmatprep.mubr.f32.mxu0 %v1517
    %1656 = vmatmul.mubr.f32.gmra.mxu0 %v1516
    %v1657 = vpop.f32.mrf.mxu0
    %v1658 = vadd.f32 %v1589, %v1657
    %v1659 = vpop.f32.mrf.mxu0
    %1660 = vdwg.mxu0
    %1661 = vmatprep.subr.mxu0 0.0
    %1662 = vmatpush1.msra.mxu0 %v1567
    %1663 = vmatprep.subr.mxu0 0.0
    %1664 = vmatpush1.msra.mxu0 %v1566
    %1665 = vmatprep.subr.mxu0 0.0
    %1666 = vmatpush1.msra.mxu0 %v1565
    %1667 = vmatprep.subr.mxu0 0.0
    %1668 = vmatpush1.msra.mxu0 %v1564
    %1669 = vmatprep.subr.mxu0 0.0
    %1670 = vmatpush1.msra.mxu0 %v1563
    %1671 = vmatprep.subr.mxu0 0.0
    %1672 = vmatpush1.msra.mxu0 %v1562
    %1673 = vmatprep.subr.mxu0 0.0
    %1674 = vmatpush1.msra.mxu0 %v1561
    %1675 = vmatprep.subr.mxu0 0.0
    %1676 = vmatpush1.msra.mxu0 %v1560
    %1677 = vmatprep.subr.mxu0 0.0
    %1678 = vmatpush1.msra.mxu0 %v1559
    %1679 = vmatprep.subr.mxu0 0.0
    %1680 = vmatpush1.msra.mxu0 %v1558
    %1681 = vmatprep.subr.mxu0 0.0
    %1682 = vmatpush1.msra.mxu0 %v1557
    %1683 = vmatprep.subr.mxu0 0.0
    %1684 = vmatpush1.msra.mxu0 %v1556
    %1685 = vmatprep.subr.mxu0 0.0
    %1686 = vmatpush1.msra.mxu0 %v1555
    %1687 = vmatprep.subr.mxu0 0.0
    %1688 = vmatpush1.msra.mxu0 %v1554
    %1689 = vmatprep.subr.mxu0 0.0
    %1690 = vmatpush1.msra.mxu0 %v1553
    %1691 = vmatprep.subr.mxu0 0.0
    %1692 = vmatpush1.msra.mxu0 %v1552
    %1693 = vmatprep.subr.mxu0 0.0
    %1694 = vmatpush2.msra.mxu0 %v1583
    %1695 = vmatprep.subr.mxu0 0.0
    %1696 = vmatpush2.msra.mxu0 %v1582
    %1697 = vmatprep.subr.mxu0 0.0
    %1698 = vmatpush2.msra.mxu0 %v1581
    %1699 = vmatprep.subr.mxu0 0.0
    %1700 = vmatpush2.msra.mxu0 %v1580
    %1701 = vmatprep.subr.mxu0 0.0
    %1702 = vmatpush2.msra.mxu0 %v1579
    %1703 = vmatprep.subr.mxu0 0.0
    %1704 = vmatpush2.msra.mxu0 %v1578
    %1705 = vmatprep.subr.mxu0 0.0
    %1706 = vmatpush2.msra.mxu0 %v1577
    %1707 = vmatprep.subr.mxu0 0.0
    %1708 = vmatpush2.msra.mxu0 %v1576
    %1709 = vmatprep.subr.mxu0 0.0
    %1710 = vmatpush2.msra.mxu0 %v1575
    %1711 = vmatprep.subr.mxu0 0.0
    %1712 = vmatpush2.msra.mxu0 %v1574
    %1713 = vmatprep.subr.mxu0 0.0
    %1714 = vmatpush2.msra.mxu0 %v1573
    %1715 = vmatprep.subr.mxu0 0.0
    %1716 = vmatpush2.msra.mxu0 %v1572
    %1717 = vmatprep.subr.mxu0 0.0
    %1718 = vmatpush2.msra.mxu0 %v1571
    %1719 = vmatprep.subr.mxu0 0.0
    %1720 = vmatpush2.msra.mxu0 %v1570
    %1721 = vmatprep.subr.mxu0 0.0
    %1722 = vmatpush2.msra.mxu0 %v1569
    %1723 = vmatprep.subr.mxu0 0.0
    %1724 = vmatpush2.msra.mxu0 %v1568
    %1725 = vmatprep.mubr.f32.mxu0 %v1519
    %1726 = vmatmul.mubr.f32.gmra.mxu0 %v1518
    %v1727 = vpop.f32.mrf.mxu0
    %v1728 = vadd.f32 %v1658, %v1727
    %v1729 = vpop.f32.mrf.mxu0
    %1730 = vdwg.mxu0
    %1731 = vmax.xlane.f32.xlu0 %v1728
    %v1732 = vpop.xlane.xlu0 %1731
    %v1733 = vsub.f32 %v1728, %v1732
    %v1734 = vmul.f32 %v1733, 1.442695
    %v1735 = vpow.pop %v1734
    %1736 = vadd.xlane.f32.xlu0 %v1735
    %v1737 = vpop.xlane.xlu0 %1736
    %v1738 = vlog2.pop %v1737
    %v1739 = vmul.f32 %v1738, 0.6931472
    %v1740 = vsub.f32 %v1733, %v1739
    %1741 = vst [vmem:[#allocation10] sm:$0xff] %v1740
    // Predicated region
    $region38: #{tpu_custom_call.1} parent=1 // pred_check
      _
    $region39: #{tpu_custom_call.1} parent=1 // pred_check_branch
      %1743 = sbr.rel (0) target = $region41
    $region40: #{tpu_custom_call.1} parent=1 // pred_region
      %s1745 = ssub.s32 128, 128
      %1746 = vsyncadd [#allocation4], %s1745
      %s1748 = sshll.u32 [#allocation10], 4
      %s1749 = int_to_ptr.vmem [resolvable:$true] %s1748
      %1751 = dma.vmem_to_hbm [thread:$0]  %s1749, 128, %s5, [#allocation4]
    $region41: #{tpu_custom_call.1} parent=1 // pred_fallthru
      _
    // Predicated region
    $region42: #{tpu_custom_call.1} parent=1 // pred_check
      _
    $region43: #{tpu_custom_call.1} parent=1 // pred_check_branch
      %1753 = sbr.rel (0) target = $region45
    $region44: #{tpu_custom_call.1} parent=1 // pred_region
      %1754 = dma.done [#allocation4], 128
    $region45: #{tpu_custom_call.1} parent=1 // pred_fallthru
      _
    %1755 = vsyncpa [#allocation3], 1
    %1756 = vsyncpa [#allocation6], 1
    %1757 = vsyncpa [#allocation9], 1
    %1758 = vsyncpa [#allocation4], 1

</llo_original>
